<compile_context>
chip_gen: v6e
topology: v6e:2x2x1
jax: 0.10.0
libtpu: 0.0.40
codegen_flags: <defaults>
</compile_context>

<pallas_src>
import functools

import jax
import jax.numpy as jnp
from jax import lax
from jax.experimental import pallas as pl
from jax.experimental.pallas import tpu as pltpu

LANES = 128
SUBLANES = 8


def _round_up(x, m):
    return (x + m - 1) // m * m


# ----------------------------------------------------------------------------
# Kernel: one grid step == one chunk of T_CHUNK timesteps for one row block.
# ----------------------------------------------------------------------------
def rnn_seq_kernel(x_ref, h0_ref, wx_ref, wh_ref, b_ref,
                   out_ref, hfinal_ref, h_scratch,
                   *, hidden_size, output_size, h_pad,
                   t_chunk, t_total, batch, row_block):
    rb = pl.program_id(0)   # row-block (parallel) axis
    tc = pl.program_id(1)   # time-chunk (arbitrary / carried) axis

    # Initialize the carried hidden slab from h0 on the first chunk only.
    @pl.when(tc == 0)
    def _():
        h_scratch[...] = h0_ref[...]

    # ---- loop-invariant values, hoisted out of the per-timestep loop ----
    wx = wx_ref[...]                                   # (I, P)      resident
    wh = wh_ref[...]                                   # (H_pad, P)  resident
    bias = b_ref[...]                                  # (1, P)
    lanes = wx.shape[1]                                # P (static)

    col = lax.broadcasted_iota(jnp.int32, (row_block, lanes), 1)
    is_logit = (col >= hidden_size) & (col < hidden_size + output_size)
    row = lax.broadcasted_iota(jnp.int32, (row_block, lanes), 0)
    row_valid = (rb * row_block + row) < batch

    needs_tail_guard = (t_total % t_chunk) != 0        # static Python bool

    def step(i, carry):
        x_t = x_ref[i]                                 # (RB, I)
        h = h_scratch[...]                             # (RB, P) f32 slab

        # Fused i2h + i2o matmul (one result slab):
        #   z[:, 0:H)   = new hidden
        #   z[:, H:H+O) = logits
        #   z[:, H+O:P) = 0
        z = (jnp.dot(x_t.astype(wx.dtype), wx,
                     preferred_element_type=jnp.float32)
             + jnp.dot(h[:, :h_pad].astype(wh.dtype), wh,
                       preferred_element_type=jnp.float32)
             + bias)

        # Zero padded batch rows so they never drift over long sequences.
        z = jnp.where(row_valid, z, 0.0)

        if needs_tail_guard:
            # Padded timesteps (beyond t_total) must not advance the carry.
            valid_t = (tc * t_chunk + i) < t_total
            z = jnp.where(valid_t, z, h)

        h_scratch[...] = z

        # Masked log-softmax over the logit columns only (f32 throughout).
        masked = jnp.where(is_logit, z, -1e30)
        m = jnp.max(masked, axis=1, keepdims=True)
        shifted = masked - m
        lse = jnp.log(jnp.sum(jnp.exp(shifted), axis=1, keepdims=True))
        logp = shifted - lse

        # Lane-dense output slab: hidden in cols [0:H), log-probs in [H:H+O).
        out_ref[i] = jnp.where(is_logit, logp, z).astype(out_ref.dtype)
        return carry

    lax.fori_loop(0, t_chunk, step, 0, unroll=True)

    # Final hidden written once, in f32, independent of the streamed dtype.
    @pl.when(tc == pl.num_programs(1) - 1)
    def _():
        hfinal_ref[...] = h_scratch[...]


# ----------------------------------------------------------------------------
# One-time parameter preparation (hoisted out of the hot path).
# ----------------------------------------------------------------------------
def prepare_fused_params(w_i2h, b_i2h, w_i2o, b_i2o, input_size,
                         mxu_dtype=jnp.float32):
    """Fold the two PyTorch Linear layers into one padded fused matmul.

    PyTorch layout: w_i2h (H, I+H), w_i2o (O, I+H), y = x @ W.T + b.
    Returns wx_p (I, P), wh_p (H_pad, P), b_p (1, P) with
    P = roundup(H+O, 128), H_pad = roundup(H, 128), such that
      z = x @ wx_p + h_slab[:, :H_pad] @ wh_p + b_p
    gives z[:, :H] = i2h(combined), z[:, H:H+O] = i2o(combined), rest 0.
    """
    H = w_i2h.shape[0]
    O = w_i2o.shape[0]
    I = input_size
    P = _round_up(H + O, LANES)
    H_pad = _round_up(H, LANES)            # always <= P

    w_i2h = jnp.asarray(w_i2h, jnp.float32)
    w_i2o = jnp.asarray(w_i2o, jnp.float32)

    wx = jnp.concatenate([w_i2h[:, :I].T, w_i2o[:, :I].T], axis=1)   # (I, H+O)
    wh = jnp.concatenate([w_i2h[:, I:].T, w_i2o[:, I:].T], axis=1)   # (H, H+O)
    b = jnp.concatenate([jnp.asarray(b_i2h, jnp.float32),
                         jnp.asarray(b_i2o, jnp.float32)])           # (H+O,)

    wx_p = jnp.zeros((I, P), jnp.float32).at[:, :H + O].set(wx).astype(mxu_dtype)
    # Rows [H:H_pad) stay zero so logit / padded columns of the carried slab
    # never contaminate the next step.
    wh_p = jnp.zeros((H_pad, P), jnp.float32).at[:H, :H + O].set(wh).astype(mxu_dtype)
    b_p = jnp.zeros((1, P), jnp.float32).at[0, :H + O].set(b)        # bias stays f32
    return wx_p, wh_p, b_p


# ----------------------------------------------------------------------------
# Fused-sequence forward: whole recurrence in one pallas_call.
# ----------------------------------------------------------------------------
def rnn_forward_seq(xs, h0, wx_p, wh_p, b_p, hidden_size, output_size,
                    *, t_chunk=8, row_block=None, out_dtype=jnp.float32):
    """xs: (T, B, I), h0: (B, H)  ->  (log_probs (T, B, O), final hidden (B, H))."""
    T, B, I = xs.shape
    H, O = hidden_size, output_size
    H_pad, P = wh_p.shape
    assert wx_p.shape == (I, P)

    B_pad = max(_round_up(B, SUBLANES), SUBLANES)
    RB = row_block or B_pad                     # rows per (parallel) block
    B_pad = _round_up(B_pad, RB)

    t_chunk = max(1, min(t_chunk, T))
    T_pad = _round_up(T, t_chunk)

    xs_p = jnp.zeros((T_pad, B_pad, I), jnp.float32).at[:T, :B, :].set(
        xs.astype(jnp.float32))
    h0_p = jnp.zeros((B_pad, P), jnp.float32).at[:B, :H].set(
        h0.astype(jnp.float32))

    cost = pl.CostEstimate(
        flops=2 * T_pad * B_pad * (I + H_pad) * P,
        transcendentals=T_pad * B_pad * (P + 1),
        bytes_accessed=(xs_p.size * 4 + h0_p.size * 4
                        + wx_p.size * wx_p.dtype.itemsize
                        + wh_p.size * wh_p.dtype.itemsize
                        + b_p.size * 4
                        + T_pad * B_pad * P * jnp.dtype(out_dtype).itemsize
                        + B_pad * P * 4),
    )

    kernel = functools.partial(
        rnn_seq_kernel,
        hidden_size=H, output_size=O, h_pad=H_pad,
        t_chunk=t_chunk, t_total=T, batch=B, row_block=RB)

    out_slab, hfinal = pl.pallas_call(
        kernel,
        out_shape=(
            jax.ShapeDtypeStruct((T_pad, B_pad, P), out_dtype),   # streamed
            jax.ShapeDtypeStruct((B_pad, P), jnp.float32),        # final hidden
        ),
        grid_spec=pltpu.PrefetchScalarGridSpec(
            num_scalar_prefetch=0,
            grid=(B_pad // RB, T_pad // t_chunk),
            in_specs=[
                pl.BlockSpec((t_chunk, RB, I), lambda rb, tc: (tc, rb, 0)),  # x chunk
                pl.BlockSpec((RB, P), lambda rb, tc: (rb, 0)),               # h0
                pl.BlockSpec((I, P), lambda rb, tc: (0, 0)),                 # wx resident
                pl.BlockSpec((H_pad, P), lambda rb, tc: (0, 0)),             # wh resident
                pl.BlockSpec((1, P), lambda rb, tc: (0, 0)),                 # bias resident
            ],
            out_specs=(
                pl.BlockSpec((t_chunk, RB, P), lambda rb, tc: (tc, rb, 0)),  # streamed
                pl.BlockSpec((RB, P), lambda rb, tc: (rb, 0)),               # final hidden
            ),
            scratch_shapes=[pltpu.VMEM((RB, P), jnp.float32)],   # carried hidden slab
        ),
        compiler_params=pltpu.CompilerParams(
            # Row blocks are independent -> "parallel" (feeds v7x's 2nd TC for
            # real batches). Time carries the hidden state -> "arbitrary".
            dimension_semantics=("parallel", "arbitrary"),
        ),
        cost_estimate=cost,
    )(xs_p, h0_p, wx_p, wh_p, b_p)

    log_probs = out_slab[:T, :B, H:H + O]      # (T, B, O)
    hidden = hfinal[:B, :H]                    # (B, H), f32
    return log_probs, hidden


def rnn_forward(x, hidden, w_i2h, b_i2h, w_i2o, b_i2o):
    """Single-cell API matching the PyTorch module's forward (one timestep)."""
    I = x.shape[1]
    H = w_i2h.shape[0]
    O = w_i2o.shape[0]
    wx_p, wh_p, b_p = prepare_fused_params(w_i2h, b_i2h, w_i2o, b_i2o, I)
    log_probs, new_hidden = rnn_forward_seq(
        x[None], hidden, wx_p, wh_p, b_p, H, O, t_chunk=1)
    return log_probs[0], new_hidden


# ----------------------------------------------------------------------------
# Reference + init helpers
# ----------------------------------------------------------------------------
def init_linear_params(key, in_features, out_features):
    """PyTorch-default-style init: U(-1/sqrt(fan_in), 1/sqrt(fan_in))."""
    kw, kb = jax.random.split(key)
    bound = 1.0 / jnp.sqrt(jnp.float32(in_features))
    w = jax.random.uniform(kw, (out_features, in_features), jnp.float32,
                           minval=-bound, maxval=bound)
    b = jax.random.uniform(kb, (out_features,), jnp.float32,
                           minval=-bound, maxval=bound)
    return w, b


def rnn_reference_seq(xs, h0, w_i2h, b_i2h, w_i2o, b_i2o):
    hi = lax.Precision.HIGHEST

    def step(h, x):
        combined = jnp.concatenate([x, h], axis=1)
        h_new = jnp.dot(combined, w_i2h.T, precision=hi) + b_i2h
        logits = jnp.dot(combined, w_i2o.T, precision=hi) + b_i2o
        return h_new, jax.nn.log_softmax(logits, axis=1)

    h_final, logps = lax.scan(step, h0, xs)
    return logps, h_final


if __name__ == "__main__":
    # Small shapes consistent with the module: one-hot-ish letter input,
    # hidden state, language log-probs; short name as the sequence.
    batch = 2
    seq_len = 8
    input_size = 16
    hidden_size = 32
    output_size = 8

    key = jax.random.PRNGKey(0)
    k_x, k_i2h, k_i2o = jax.random.split(key, 3)

    xs = jax.random.normal(k_x, (seq_len, batch, input_size), jnp.float32)
    h0 = jnp.zeros((batch, hidden_size), jnp.float32)  # initHidden (per-sample)

    w_i2h, b_i2h = init_linear_params(k_i2h, input_size + hidden_size, hidden_size)
    w_i2o, b_i2o = init_linear_params(k_i2o, input_size + hidden_size, output_size)

    # Plain-JAX reference (exact PyTorch cell semantics, scanned over time).
    ref_logps, ref_hidden = rnn_reference_seq(xs, h0, w_i2h, b_i2h, w_i2o, b_i2o)

    # ---- f32 MXU path, time-chunked (2 chunks of 4 steps): tight check ----
    wx_p, wh_p, b_p = prepare_fused_params(w_i2h, b_i2h, w_i2o, b_i2o, input_size)
    log_probs, hidden_final = rnn_forward_seq(
        xs, h0, wx_p, wh_p, b_p, hidden_size, output_size, t_chunk=4)
    jax.block_until_ready((log_probs, hidden_final))

    assert log_probs.shape == (seq_len, batch, output_size)
    assert hidden_final.shape == (batch, hidden_size)
    assert jnp.allclose(log_probs, ref_logps, atol=1e-3, rtol=1e-3), "log_softmax mismatch"
    assert jnp.allclose(hidden_final, ref_hidden, atol=1e-3, rtol=1e-3), "hidden mismatch"

    # ---- tail-guard path: T not a multiple of the time chunk ----
    ref_lp7, ref_h7 = rnn_reference_seq(xs[:7], h0, w_i2h, b_i2h, w_i2o, b_i2o)
    lp7, h7 = rnn_forward_seq(
        xs[:7], h0, wx_p, wh_p, b_p, hidden_size, output_size, t_chunk=4)
    jax.block_until_ready((lp7, h7))
    assert jnp.allclose(lp7, ref_lp7, atol=1e-3, rtol=1e-3), "tail log_softmax mismatch"
    assert jnp.allclose(h7, ref_h7, atol=1e-3, rtol=1e-3), "tail hidden mismatch"

    # ---- bf16 MXU operands + bf16 streamed output: loose check ----
    wx_b, wh_b, b_b = prepare_fused_params(
        w_i2h, b_i2h, w_i2o, b_i2o, input_size, mxu_dtype=jnp.bfloat16)
    lp_b, h_b = rnn_forward_seq(
        xs, h0, wx_b, wh_b, b_b, hidden_size, output_size,
        t_chunk=8, out_dtype=jnp.bfloat16)
    jax.block_until_ready((lp_b, h_b))
    lp_b32 = jnp.asarray(lp_b, jnp.float32)
    assert bool(jnp.isfinite(lp_b32).all()) and bool(jnp.isfinite(h_b).all())
    assert jnp.allclose(lp_b32, ref_logps, atol=1e-1, rtol=1e-1), "bf16 log_softmax mismatch"
    assert jnp.allclose(h_b, ref_hidden, atol=1e-1, rtol=1e-1), "bf16 hidden mismatch"

    # ---- single-cell API (matches the module's forward signature) ----
    lp1, h1 = rnn_forward(xs[0], h0, w_i2h, b_i2h, w_i2o, b_i2o)
    jax.block_until_ready((lp1, h1))
    assert jnp.allclose(lp1, ref_logps[0], atol=1e-3, rtol=1e-3)

    print("KERNEL_OK")
</pallas_src>

<mosaic_0001>
module attributes {stable_mosaic.version = 11 : i64} {
  func.func @rnn_seq_kernel(%arg0: i32, %arg1: i32, %arg2: memref<4x8x16xf32, #tpu.memory_space<vmem>>, %arg3: memref<8x128xf32, #tpu.memory_space<vmem>>, %arg4: memref<16x128xf32, #tpu.memory_space<vmem>>, %arg5: memref<128x128xf32, #tpu.memory_space<vmem>>, %arg6: memref<1x128xf32, #tpu.memory_space<vmem>>, %arg7: memref<4x8x128xf32, #tpu.memory_space<vmem>>, %arg8: memref<8x128xf32, #tpu.memory_space<vmem>>, %arg9: memref<8x128xf32, #tpu.memory_space<vmem>>) attributes {dimension_semantics = [#tpu.dimension_semantics<parallel>, #tpu.dimension_semantics<arbitrary>], iteration_bounds = array<i64: 1, 2>, scalar_prefetch = 0 : i64, scratch_operands = 1 : i64, tpu.core_type = #tpu.core_type<tc>, window_params = [{transform_indices = @transform_0, window_bounds = array<i64: 4, 8, 16>}, {transform_indices = @transform_1, window_bounds = array<i64: 8, 128>}, {pipeline_mode = #tpu.pipeline_mode<synchronous>, transform_indices = @transform_2, window_bounds = array<i64: 16, 128>}, {pipeline_mode = #tpu.pipeline_mode<synchronous>, transform_indices = @transform_3, window_bounds = array<i64: 128, 128>}, {pipeline_mode = #tpu.pipeline_mode<synchronous>, transform_indices = @transform_4, window_bounds = array<i64: 1, 128>}, {transform_indices = @transform_5, window_bounds = array<i64: 4, 8, 128>}, {transform_indices = @transform_6, window_bounds = array<i64: 8, 128>}]} {
    %c0_i32 = arith.constant 0 : i32
    %0 = arith.cmpi eq, %arg1, %c0_i32 : i32
    %1 = arith.extui %0 : i1 to i32
    %c0_i32_0 = arith.constant 0 : i32
    %2 = arith.cmpi ne, %1, %c0_i32_0 : i32
    scf.if %2 {
      %c0_65 = arith.constant 0 : index
      %c0_66 = arith.constant 0 : index
      %137 = vector.load %arg3[%c0_65, %c0_66] : memref<8x128xf32, #tpu.memory_space<vmem>>, vector<8x128xf32>
      %c0_67 = arith.constant 0 : index
      %c0_68 = arith.constant 0 : index
      %138 = vector.load %arg9[%c0_67, %c0_68] : memref<8x128xf32, #tpu.memory_space<vmem>>, vector<8x128xf32>
      tpu.vector_store %arg9[%c0_67, %c0_68], %137 {strides = array<i32>} : memref<8x128xf32, #tpu.memory_space<vmem>>, vector<8x128xf32>,
    } else {
    }
    %c0 = arith.constant 0 : index
    %c0_1 = arith.constant 0 : index
    %3 = vector.load %arg4[%c0, %c0_1] : memref<16x128xf32, #tpu.memory_space<vmem>>, vector<16x128xf32>
    %c0_2 = arith.constant 0 : index
    %c0_3 = arith.constant 0 : index
    %4 = vector.load %arg5[%c0_2, %c0_3] : memref<128x128xf32, #tpu.memory_space<vmem>>, vector<128x128xf32>
    %c0_4 = arith.constant 0 : index
    %c0_5 = arith.constant 0 : index
    %5 = vector.load %arg6[%c0_4, %c0_5] : memref<1x128xf32, #tpu.memory_space<vmem>>, vector<1x128xf32>
    %6 = tpu.iota {dimensions = array<i32: 1>} : vector<8x128xi32>
    %c32_i32 = arith.constant 32 : i32
    %7 = vector.broadcast %c32_i32 : i32 to vector<8x128xi32>
    %8 = arith.cmpi sge, %6, %7 : vector<8x128xi32>
    %c40_i32 = arith.constant 40 : i32
    %9 = vector.broadcast %c40_i32 : i32 to vector<8x128xi32>
    %10 = arith.cmpi slt, %6, %9 : vector<8x128xi32>
    %11 = arith.andi %8, %10 : vector<8x128xi1>
    %12 = tpu.iota {dimensions = array<i32: 0>} : vector<8x128xi32>
    %c8_i32 = arith.constant 8 : i32
    %13 = arith.muli %arg0, %c8_i32 : i32
    %14 = vector.broadcast %13 : i32 to vector<8x128xi32>
    %15 = arith.addi %14, %12 : vector<8x128xi32>
    %c2_i32 = arith.constant 2 : i32
    %16 = vector.broadcast %c2_i32 : i32 to vector<8x128xi32>
    %17 = arith.cmpi slt, %15, %16 : vector<8x128xi32>
    %c0_i32_6 = arith.constant 0 : i32
    %18 = arith.index_cast %c0_i32_6 : i32 to index
    %c0_7 = arith.constant 0 : index
    %c0_8 = arith.constant 0 : index
    %19 = vector.load %arg2[%18, %c0_7, %c0_8] : memref<4x8x16xf32, #tpu.memory_space<vmem>>, vector<1x8x16xf32>
    %20 = vector.shape_cast %19 : vector<1x8x16xf32> to vector<8x16xf32>
    %c0_9 = arith.constant 0 : index
    %c0_10 = arith.constant 0 : index
    %21 = vector.load %arg9[%c0_9, %c0_10] : memref<8x128xf32, #tpu.memory_space<vmem>>, vector<8x128xf32>
    %cst = arith.constant dense<0.000000e+00> : vector<8x128xf32>
    %22 = tpu.matmul %20, %3, %cst {dimension_numbers = #tpu.dot_dimension_numbers<[1], [0], [0], [1], [0, 0, 1, 1], [], []>} : vector<8x16xf32>, vector<16x128xf32>, vector<8x128xf32> -> vector<8x128xf32>
    %cst_11 = arith.constant dense<0.000000e+00> : vector<8x128xf32>
    %23 = tpu.matmul %21, %4, %cst_11 {dimension_numbers = #tpu.dot_dimension_numbers<[1], [0], [0], [1], [0, 0, 1, 1], [], []>} : vector<8x128xf32>, vector<128x128xf32>, vector<8x128xf32> -> vector<8x128xf32>
    %24 = arith.addf %22, %23 : vector<8x128xf32>
    %25 = vector.broadcast %5 : vector<1x128xf32> to vector<8x128xf32>
    %26 = arith.addf %24, %25 : vector<8x128xf32>
    %cst_12 = arith.constant 0.000000e+00 : f32
    %27 = vector.broadcast %cst_12 : f32 to vector<8x128xf32>
    %28 = arith.select %17, %26, %27 : vector<8x128xi1>, vector<8x128xf32>
    %c0_13 = arith.constant 0 : index
    %c0_14 = arith.constant 0 : index
    %29 = vector.load %arg9[%c0_13, %c0_14] : memref<8x128xf32, #tpu.memory_space<vmem>>, vector<8x128xf32>
    tpu.vector_store %arg9[%c0_13, %c0_14], %28 {strides = array<i32>} : memref<8x128xf32, #tpu.memory_space<vmem>>, vector<8x128xf32>,
    %cst_15 = arith.constant -1.000000e+30 : f32
    %30 = vector.broadcast %cst_15 : f32 to vector<8x128xf32>
    %31 = arith.select %11, %28, %30 : vector<8x128xi1>, vector<8x128xf32>
    %cst_16 = arith.constant dense<0xFF800000> : vector<8xf32>
    %32 = vector.multi_reduction <maximumf>, %31, %cst_16 [1] : vector<8x128xf32> to vector<8xf32>
    %33 = vector.shape_cast %32 : vector<8xf32> to vector<8x1xf32>
    %34 = vector.broadcast %33 : vector<8x1xf32> to vector<8x128xf32>
    %35 = arith.subf %31, %34 : vector<8x128xf32>
    %36 = math.exp %35 : vector<8x128xf32>
    %cst_17 = arith.constant dense<0.000000e+00> : vector<8xf32>
    %37 = vector.multi_reduction <add>, %36, %cst_17 [1] : vector<8x128xf32> to vector<8xf32>
    %38 = vector.shape_cast %37 : vector<8xf32> to vector<8x1xf32>
    %39 = math.log %38 : vector<8x1xf32>
    %40 = vector.broadcast %39 : vector<8x1xf32> to vector<8x128xf32>
    %41 = arith.subf %35, %40 : vector<8x128xf32>
    %42 = arith.select %11, %41, %28 : vector<8x128xi1>, vector<8x128xf32>
    %43 = arith.index_cast %c0_i32_6 : i32 to index
    %c0_18 = arith.constant 0 : index
    %c0_19 = arith.constant 0 : index
    %44 = vector.load %arg7[%43, %c0_18, %c0_19] : memref<4x8x128xf32, #tpu.memory_space<vmem>>, vector<1x8x128xf32>
    %45 = vector.shape_cast %44 : vector<1x8x128xf32> to vector<8x128xf32>
    %46 = vector.shape_cast %42 : vector<8x128xf32> to vector<1x8x128xf32>
    tpu.vector_store %arg7[%43, %c0_18, %c0_19], %46 {strides = array<i32>} : memref<4x8x128xf32, #tpu.memory_space<vmem>>, vector<1x8x128xf32>,
    %c1_i32 = arith.constant 1 : i32
    %47 = arith.index_cast %c1_i32 : i32 to index
    %c0_20 = arith.constant 0 : index
    %c0_21 = arith.constant 0 : index
    %48 = vector.load %arg2[%47, %c0_20, %c0_21] : memref<4x8x16xf32, #tpu.memory_space<vmem>>, vector<1x8x16xf32>
    %49 = vector.shape_cast %48 : vector<1x8x16xf32> to vector<8x16xf32>
    %c0_22 = arith.constant 0 : index
    %c0_23 = arith.constant 0 : index
    %50 = vector.load %arg9[%c0_22, %c0_23] : memref<8x128xf32, #tpu.memory_space<vmem>>, vector<8x128xf32>
    %cst_24 = arith.constant dense<0.000000e+00> : vector<8x128xf32>
    %51 = tpu.matmul %49, %3, %cst_24 {dimension_numbers = #tpu.dot_dimension_numbers<[1], [0], [0], [1], [0, 0, 1, 1], [], []>} : vector<8x16xf32>, vector<16x128xf32>, vector<8x128xf32> -> vector<8x128xf32>
    %cst_25 = arith.constant dense<0.000000e+00> : vector<8x128xf32>
    %52 = tpu.matmul %50, %4, %cst_25 {dimension_numbers = #tpu.dot_dimension_numbers<[1], [0], [0], [1], [0, 0, 1, 1], [], []>} : vector<8x128xf32>, vector<128x128xf32>, vector<8x128xf32> -> vector<8x128xf32>
    %53 = arith.addf %51, %52 : vector<8x128xf32>
    %54 = vector.broadcast %5 : vector<1x128xf32> to vector<8x128xf32>
    %55 = arith.addf %53, %54 : vector<8x128xf32>
    %cst_26 = arith.constant 0.000000e+00 : f32
    %56 = vector.broadcast %cst_26 : f32 to vector<8x128xf32>
    %57 = arith.select %17, %55, %56 : vector<8x128xi1>, vector<8x128xf32>
    %c0_27 = arith.constant 0 : index
    %c0_28 = arith.constant 0 : index
    %58 = vector.load %arg9[%c0_27, %c0_28] : memref<8x128xf32, #tpu.memory_space<vmem>>, vector<8x128xf32>
    tpu.vector_store %arg9[%c0_27, %c0_28], %57 {strides = array<i32>} : memref<8x128xf32, #tpu.memory_space<vmem>>, vector<8x128xf32>,
    %cst_29 = arith.constant -1.000000e+30 : f32
    %59 = vector.broadcast %cst_29 : f32 to vector<8x128xf32>
    %60 = arith.select %11, %57, %59 : vector<8x128xi1>, vector<8x128xf32>
    %cst_30 = arith.constant dense<0xFF800000> : vector<8xf32>
    %61 = vector.multi_reduction <maximumf>, %60, %cst_30 [1] : vector<8x128xf32> to vector<8xf32>
    %62 = vector.shape_cast %61 : vector<8xf32> to vector<8x1xf32>
    %63 = vector.broadcast %62 : vector<8x1xf32> to vector<8x128xf32>
    %64 = arith.subf %60, %63 : vector<8x128xf32>
    %65 = math.exp %64 : vector<8x128xf32>
    %cst_31 = arith.constant dense<0.000000e+00> : vector<8xf32>
    %66 = vector.multi_reduction <add>, %65, %cst_31 [1] : vector<8x128xf32> to vector<8xf32>
    %67 = vector.shape_cast %66 : vector<8xf32> to vector<8x1xf32>
    %68 = math.log %67 : vector<8x1xf32>
    %69 = vector.broadcast %68 : vector<8x1xf32> to vector<8x128xf32>
    %70 = arith.subf %64, %69 : vector<8x128xf32>
    %71 = arith.select %11, %70, %57 : vector<8x128xi1>, vector<8x128xf32>
    %72 = arith.index_cast %c1_i32 : i32 to index
    %c0_32 = arith.constant 0 : index
    %c0_33 = arith.constant 0 : index
    %73 = vector.load %arg7[%72, %c0_32, %c0_33] : memref<4x8x128xf32, #tpu.memory_space<vmem>>, vector<1x8x128xf32>
    %74 = vector.shape_cast %73 : vector<1x8x128xf32> to vector<8x128xf32>
    %75 = vector.shape_cast %71 : vector<8x128xf32> to vector<1x8x128xf32>
    tpu.vector_store %arg7[%72, %c0_32, %c0_33], %75 {strides = array<i32>} : memref<4x8x128xf32, #tpu.memory_space<vmem>>, vector<1x8x128xf32>,
    %c2_i32_34 = arith.constant 2 : i32
    %76 = arith.index_cast %c2_i32_34 : i32 to index
    %c0_35 = arith.constant 0 : index
    %c0_36 = arith.constant 0 : index
    %77 = vector.load %arg2[%76, %c0_35, %c0_36] : memref<4x8x16xf32, #tpu.memory_space<vmem>>, vector<1x8x16xf32>
    %78 = vector.shape_cast %77 : vector<1x8x16xf32> to vector<8x16xf32>
    %c0_37 = arith.constant 0 : index
    %c0_38 = arith.constant 0 : index
    %79 = vector.load %arg9[%c0_37, %c0_38] : memref<8x128xf32, #tpu.memory_space<vmem>>, vector<8x128xf32>
    %cst_39 = arith.constant dense<0.000000e+00> : vector<8x128xf32>
    %80 = tpu.matmul %78, %3, %cst_39 {dimension_numbers = #tpu.dot_dimension_numbers<[1], [0], [0], [1], [0, 0, 1, 1], [], []>} : vector<8x16xf32>, vector<16x128xf32>, vector<8x128xf32> -> vector<8x128xf32>
    %cst_40 = arith.constant dense<0.000000e+00> : vector<8x128xf32>
    %81 = tpu.matmul %79, %4, %cst_40 {dimension_numbers = #tpu.dot_dimension_numbers<[1], [0], [0], [1], [0, 0, 1, 1], [], []>} : vector<8x128xf32>, vector<128x128xf32>, vector<8x128xf32> -> vector<8x128xf32>
    %82 = arith.addf %80, %81 : vector<8x128xf32>
    %83 = vector.broadcast %5 : vector<1x128xf32> to vector<8x128xf32>
    %84 = arith.addf %82, %83 : vector<8x128xf32>
    %cst_41 = arith.constant 0.000000e+00 : f32
    %85 = vector.broadcast %cst_41 : f32 to vector<8x128xf32>
    %86 = arith.select %17, %84, %85 : vector<8x128xi1>, vector<8x128xf32>
    %c0_42 = arith.constant 0 : index
    %c0_43 = arith.constant 0 : index
    %87 = vector.load %arg9[%c0_42, %c0_43] : memref<8x128xf32, #tpu.memory_space<vmem>>, vector<8x128xf32>
    tpu.vector_store %arg9[%c0_42, %c0_43], %86 {strides = array<i32>} : memref<8x128xf32, #tpu.memory_space<vmem>>, vector<8x128xf32>,
    %cst_44 = arith.constant -1.000000e+30 : f32
    %88 = vector.broadcast %cst_44 : f32 to vector<8x128xf32>
    %89 = arith.select %11, %86, %88 : vector<8x128xi1>, vector<8x128xf32>
    %cst_45 = arith.constant dense<0xFF800000> : vector<8xf32>
    %90 = vector.multi_reduction <maximumf>, %89, %cst_45 [1] : vector<8x128xf32> to vector<8xf32>
    %91 = vector.shape_cast %90 : vector<8xf32> to vector<8x1xf32>
    %92 = vector.broadcast %91 : vector<8x1xf32> to vector<8x128xf32>
    %93 = arith.subf %89, %92 : vector<8x128xf32>
    %94 = math.exp %93 : vector<8x128xf32>
    %cst_46 = arith.constant dense<0.000000e+00> : vector<8xf32>
    %95 = vector.multi_reduction <add>, %94, %cst_46 [1] : vector<8x128xf32> to vector<8xf32>
    %96 = vector.shape_cast %95 : vector<8xf32> to vector<8x1xf32>
    %97 = math.log %96 : vector<8x1xf32>
    %98 = vector.broadcast %97 : vector<8x1xf32> to vector<8x128xf32>
    %99 = arith.subf %93, %98 : vector<8x128xf32>
    %100 = arith.select %11, %99, %86 : vector<8x128xi1>, vector<8x128xf32>
    %101 = arith.index_cast %c2_i32_34 : i32 to index
    %c0_47 = arith.constant 0 : index
    %c0_48 = arith.constant 0 : index
    %102 = vector.load %arg7[%101, %c0_47, %c0_48] : memref<4x8x128xf32, #tpu.memory_space<vmem>>, vector<1x8x128xf32>
    %103 = vector.shape_cast %102 : vector<1x8x128xf32> to vector<8x128xf32>
    %104 = vector.shape_cast %100 : vector<8x128xf32> to vector<1x8x128xf32>
    tpu.vector_store %arg7[%101, %c0_47, %c0_48], %104 {strides = array<i32>} : memref<4x8x128xf32, #tpu.memory_space<vmem>>, vector<1x8x128xf32>,
    %c3_i32 = arith.constant 3 : i32
    %105 = arith.index_cast %c3_i32 : i32 to index
    %c0_49 = arith.constant 0 : index
    %c0_50 = arith.constant 0 : index
    %106 = vector.load %arg2[%105, %c0_49, %c0_50] : memref<4x8x16xf32, #tpu.memory_space<vmem>>, vector<1x8x16xf32>
    %107 = vector.shape_cast %106 : vector<1x8x16xf32> to vector<8x16xf32>
    %c0_51 = arith.constant 0 : index
    %c0_52 = arith.constant 0 : index
    %108 = vector.load %arg9[%c0_51, %c0_52] : memref<8x128xf32, #tpu.memory_space<vmem>>, vector<8x128xf32>
    %cst_53 = arith.constant dense<0.000000e+00> : vector<8x128xf32>
    %109 = tpu.matmul %107, %3, %cst_53 {dimension_numbers = #tpu.dot_dimension_numbers<[1], [0], [0], [1], [0, 0, 1, 1], [], []>} : vector<8x16xf32>, vector<16x128xf32>, vector<8x128xf32> -> vector<8x128xf32>
    %cst_54 = arith.constant dense<0.000000e+00> : vector<8x128xf32>
    %110 = tpu.matmul %108, %4, %cst_54 {dimension_numbers = #tpu.dot_dimension_numbers<[1], [0], [0], [1], [0, 0, 1, 1], [], []>} : vector<8x128xf32>, vector<128x128xf32>, vector<8x128xf32> -> vector<8x128xf32>
    %111 = arith.addf %109, %110 : vector<8x128xf32>
    %112 = vector.broadcast %5 : vector<1x128xf32> to vector<8x128xf32>
    %113 = arith.addf %111, %112 : vector<8x128xf32>
    %cst_55 = arith.constant 0.000000e+00 : f32
    %114 = vector.broadcast %cst_55 : f32 to vector<8x128xf32>
    %115 = arith.select %17, %113, %114 : vector<8x128xi1>, vector<8x128xf32>
    %c0_56 = arith.constant 0 : index
    %c0_57 = arith.constant 0 : index
    %116 = vector.load %arg9[%c0_56, %c0_57] : memref<8x128xf32, #tpu.memory_space<vmem>>, vector<8x128xf32>
    tpu.vector_store %arg9[%c0_56, %c0_57], %115 {strides = array<i32>} : memref<8x128xf32, #tpu.memory_space<vmem>>, vector<8x128xf32>,
    %cst_58 = arith.constant -1.000000e+30 : f32
    %117 = vector.broadcast %cst_58 : f32 to vector<8x128xf32>
    %118 = arith.select %11, %115, %117 : vector<8x128xi1>, vector<8x128xf32>
    %cst_59 = arith.constant dense<0xFF800000> : vector<8xf32>
    %119 = vector.multi_reduction <maximumf>, %118, %cst_59 [1] : vector<8x128xf32> to vector<8xf32>
    %120 = vector.shape_cast %119 : vector<8xf32> to vector<8x1xf32>
    %121 = vector.broadcast %120 : vector<8x1xf32> to vector<8x128xf32>
    %122 = arith.subf %118, %121 : vector<8x128xf32>
    %123 = math.exp %122 : vector<8x128xf32>
    %cst_60 = arith.constant dense<0.000000e+00> : vector<8xf32>
    %124 = vector.multi_reduction <add>, %123, %cst_60 [1] : vector<8x128xf32> to vector<8xf32>
    %125 = vector.shape_cast %124 : vector<8xf32> to vector<8x1xf32>
    %126 = math.log %125 : vector<8x1xf32>
    %127 = vector.broadcast %126 : vector<8x1xf32> to vector<8x128xf32>
    %128 = arith.subf %122, %127 : vector<8x128xf32>
    %129 = arith.select %11, %128, %115 : vector<8x128xi1>, vector<8x128xf32>
    %130 = arith.index_cast %c3_i32 : i32 to index
    %c0_61 = arith.constant 0 : index
    %c0_62 = arith.constant 0 : index
    %131 = vector.load %arg7[%130, %c0_61, %c0_62] : memref<4x8x128xf32, #tpu.memory_space<vmem>>, vector<1x8x128xf32>
    %132 = vector.shape_cast %131 : vector<1x8x128xf32> to vector<8x128xf32>
    %133 = vector.shape_cast %129 : vector<8x128xf32> to vector<1x8x128xf32>
    tpu.vector_store %arg7[%130, %c0_61, %c0_62], %133 {strides = array<i32>} : memref<4x8x128xf32, #tpu.memory_space<vmem>>, vector<1x8x128xf32>,
    %c4_i32 = arith.constant 4 : i32
    %c1_i32_63 = arith.constant 1 : i32
    %134 = arith.cmpi eq, %arg1, %c1_i32_63 : i32
    %135 = arith.extui %134 : i1 to i32
    %c0_i32_64 = arith.constant 0 : i32
    %136 = arith.cmpi ne, %135, %c0_i32_64 : i32
    scf.if %136 {
      %c0_65 = arith.constant 0 : index
      %c0_66 = arith.constant 0 : index
      %137 = vector.load %arg9[%c0_65, %c0_66] : memref<8x128xf32, #tpu.memory_space<vmem>>, vector<8x128xf32>
      %c0_67 = arith.constant 0 : index
      %c0_68 = arith.constant 0 : index
      %138 = vector.load %arg8[%c0_67, %c0_68] : memref<8x128xf32, #tpu.memory_space<vmem>>, vector<8x128xf32>
      tpu.vector_store %arg8[%c0_67, %c0_68], %137 {strides = array<i32>} : memref<8x128xf32, #tpu.memory_space<vmem>>, vector<8x128xf32>,
    } else {
    }
    return
  }
  func.func @transform_0(%arg0: i32, %arg1: i32) -> (i32, i32, i32) {
    %c0_i32 = arith.constant 0 : i32
    %c0_i32_0 = arith.constant 0 : i32
    return %arg1, %arg0, %c0_i32 : i32, i32, i32
  }
  func.func @transform_1(%arg0: i32, %arg1: i32) -> (i32, i32) {
    %c0_i32 = arith.constant 0 : i32
    %c0_i32_0 = arith.constant 0 : i32
    return %arg0, %c0_i32 : i32, i32
  }
  func.func @transform_2(%arg0: i32, %arg1: i32) -> (i32, i32) {
    %c0_i32 = arith.constant 0 : i32
    %c0_i32_0 = arith.constant 0 : i32
    %c0_i32_1 = arith.constant 0 : i32
    return %c0_i32, %c0_i32_0 : i32, i32
  }
  func.func @transform_3(%arg0: i32, %arg1: i32) -> (i32, i32) {
    %c0_i32 = arith.constant 0 : i32
    %c0_i32_0 = arith.constant 0 : i32
    %c0_i32_1 = arith.constant 0 : i32
    return %c0_i32, %c0_i32_0 : i32, i32
  }
  func.func @transform_4(%arg0: i32, %arg1: i32) -> (i32, i32) {
    %c0_i32 = arith.constant 0 : i32
    %c0_i32_0 = arith.constant 0 : i32
    %c0_i32_1 = arith.constant 0 : i32
    return %c0_i32, %c0_i32_0 : i32, i32
  }
  func.func @transform_5(%arg0: i32, %arg1: i32) -> (i32, i32, i32) {
    %c0_i32 = arith.constant 0 : i32
    %c0_i32_0 = arith.constant 0 : i32
    return %arg1, %arg0, %c0_i32 : i32, i32, i32
  }
  func.func @transform_6(%arg0: i32, %arg1: i32) -> (i32, i32) {
    %c0_i32 = arith.constant 0 : i32
    %c0_i32_0 = arith.constant 0 : i32
    return %arg0, %c0_i32 : i32, i32
  }
}

</mosaic_0001>

<llo_original>
// kernel: tpu_custom_call.1
$region0: #{tpu_custom_call.1}
  #allocation0 [shape = 'u32[]', space=smem, size = 0x4, offset = 0x4, fixed_abs, tag = 'smem constant byte address 0x4 - core index']
  #allocation1 [shape = 'u32[144,128]{1,0:T(1,128)}', space=vmem, size = 0x12000, scoped, tag = 'internal scratch']
  #allocation2 [shape = 'f32[8,128]{1,0:T(8,128)}', space=vmem, size = 0x1000, scoped, tag = 'scratch operand']
  %s0 = inlined_call_operand.hbm [shape: f32[8,8,16], index: 0, kind: input, shape index: {}]
  %s1 = inlined_call_operand.hbm [shape: f32[8,128], index: 1, kind: input, shape index: {}]
  %s2 = inlined_call_operand.hbm [shape: f32[16,128], index: 2, kind: input, shape index: {}]
  %s3 = inlined_call_operand.hbm [shape: f32[128,128], index: 3, kind: input, shape index: {}]
  %s4 = inlined_call_operand.vmem [shape: f32[1,128], index: 4, kind: input, shape index: {}]
  %s5 = inlined_call_operand.hbm [shape: f32[8,8,128], index: 5, kind: output, shape index: {0}]
  %s6 = inlined_call_operand.hbm [shape: f32[8,128], index: 6, kind: output, shape index: {1}]
  %7 = xla_tuple %s5, %s6
  %s8 = sld [smem:[#allocation0]]
  $region85: #{tpu_custom_call.1} parent=0
    _
  %s10 = ssub.s32 1, %s8
  %s11 = scalar_select 0, %s10, %s8
  $region1: #{tpu_custom_call.1} parent=0
    #allocation3 [shape = 'u8[32768]{0}', space=vmem, size = 0x8000, scoped, tag = 'input window, operand 0']
    #allocation4 [shape = 's32[2]{0}', space=sflag, size = 0x8, scoped, tag = 'scoped memory for tpu_custom_call.1']
    #allocation5 [shape = 's32[2]{0}', space=sflag, size = 0x8, scoped, tag = 'scoped memory for tpu_custom_call.1']
    #allocation6 [shape = 'u8[4096]{0}', space=vmem, size = 0x1000, scoped, tag = 'input window, operand 1, single buffered']
    #allocation7 [shape = 's32[1]{0}', space=sflag, size = 0x4, scoped, tag = 'scoped memory for tpu_custom_call.1']
    #allocation8 [shape = 'u8[8192]{0}', space=vmem, size = 0x2000, scoped, tag = 'input window, operand 2, single buffered']
    #allocation9 [shape = 'u8[65536]{0}', space=vmem, size = 0x10000, scoped, tag = 'input window, operand 3, single buffered']
    #allocation10 [shape = 's32[1]{0}', space=sflag, size = 0x4, scoped, tag = 'scoped memory for tpu_custom_call.1']
    #allocation11 [shape = 'u8[32768]{0}', space=vmem, size = 0x8000, scoped, tag = 'output window, operand 0']
    #allocation12 [shape = 'u8[4096]{0}', space=vmem, size = 0x1000, scoped, tag = 'output window, operand 1, single buffered']
    #allocation13 [shape = 's32[1]{0}', space=sflag, size = 0x4, scoped, tag = 'scoped memory for tpu_custom_call.1']
    %12 = vsyncpa [#allocation4], 0
    %s13 = scalar_lea.sflag [#allocation4], 1
    %14 = vsyncpa %s13, 0
    %15 = vsyncpa [#allocation7], 0
    %16 = vsyncpa [#allocation10], 0
    %17 = vsyncpa [#allocation5], 0
    %s18 = scalar_lea.sflag [#allocation5], 1
    %19 = vsyncpa %s18, 0
    %20 = vsyncpa [#allocation13], 0
    loop: start=0, step=1, limit=4
    $region2: #{tpu_custom_call.1} parent=1 // loop_pre_header
      _
    $region3: #{tpu_custom_call.1} parent=1 // loop_header
      %s22 = sphi 0, %s26
      %p23 = scmp.ge.s32.totalorder %s22, 4
      %s29 = sphi 0, %s41
      %s30 = sphi 0, %s37
      %s31 = sphi 0, %s29
      %s32 = sphi 0, %s30
      %s33 = sphi 0, %s31
      %s34 = sphi 0, %s32
      %s46 = sphi 0, %s48
      %s49 = sphi 0, %s46
      %s50 = sphi 0, %s49
      %s66 = sphi 0, %s50
      %s72 = sphi 0, %s74
      %s75 = sphi 0, %s72
      %s76 = sphi 0, %s75
      %s92 = sphi 0, %s76
      %s96 = sphi 0, %s96
      %s98 = sphi 0, %s96
      %s99 = sphi 0, %s98
      %s113 = sphi 0, %s99
      %s117 = sphi 0, %s117
      %s119 = sphi 0, %s117
      %s120 = sphi 0, %s119
      %s134 = sphi 0, %s120
      %s138 = sphi 0, %s138
      %s140 = sphi 0, %s138
      %s141 = sphi 0, %s140
      %s155 = sphi 0, %s141
      %s163 = sphi 0, %s165
      %s166 = sphi 0, %s163
      %s167 = sphi 0, %s166
      %s183 = sphi 0, %s167
      %s189 = sphi 0, %s191
      %s192 = sphi 0, %s189
      %s193 = sphi 0, %s192
      %s209 = sphi 0, %s193
    $region4: #{tpu_custom_call.1} parent=1 // loop_header_branch
      %25 = sbr.rel (%p23) target = $region8
    $region5: #{tpu_custom_call.1} parent=1 // loop_body
      %s27 = ssub.s32 %s22, 1
      %s28 = ssub.s32 %s22, 2
      %s35 = sadd.s32 1, %s30
      %p36 = scmp.ge.s32.totalorder %s35, 2
      %s37 = scalar_select %p36, 0, %s35
      %s38 = sadd.s32 1, %s29
      %s39 = scalar_select %p36, %s38, %s29
      %p40 = scmp.ge.s32.totalorder %s39, 1
      %s41 = scalar_select %p40, 0, %s39
      %s42 = ssub.s32 %s30, %s37
      %s43 = ssub.s32 %s29, %s41
      %s44 = sor.u32 %s42, %s43
      %p45 = scmp.eq.s32.totalorder %s44, 0
      %s47 = sadd.s32 %s46, 1
      %s48 = scalar_select %p45, %s46, %s47
      %p51 = pneg %p45
      %p52 = scmp.eq.s32.totalorder %s22, 1
      %p53 = por %p51, %p52
      %p54 = scmp.ne.s32.totalorder %s46, %s49
      %p55 = scmp.eq.s32.totalorder %s22, 0
      %p56 = por %p54, %p55
      %p57 = scmp.ne.s32.totalorder %s46, %s49
      %p58 = scmp.eq.s32.totalorder %s27, 1
      %p59 = por %p57, %p58
      %p60 = scmp.ne.s32.totalorder %s49, %s50
      %p61 = scmp.eq.s32.totalorder %s27, 0
      %p62 = por %p60, %p61
      %p63 = scmp.ne.s32.totalorder %s49, %s50
      %p64 = scmp.eq.s32.totalorder %s28, 1
      %p65 = por %p63, %p64
      %p67 = scmp.ne.s32.totalorder %s50, %s66
      %p68 = scmp.eq.s32.totalorder %s28, 0
      %p69 = por %p67, %p68
      %s70 = ssub.s32 %s29, %s41
      %p71 = scmp.eq.s32.totalorder %s70, 0
      %s73 = sadd.s32 %s72, 1
      %s74 = scalar_select %p71, %s72, %s73
      %p77 = pneg %p71
      %p78 = scmp.eq.s32.totalorder %s22, 1
      %p79 = por %p77, %p78
      %p80 = scmp.ne.s32.totalorder %s72, %s75
      %p81 = scmp.eq.s32.totalorder %s22, 0
      %p82 = por %p80, %p81
      %p83 = scmp.ne.s32.totalorder %s72, %s75
      %p84 = scmp.eq.s32.totalorder %s27, 1
      %p85 = por %p83, %p84
      %p86 = scmp.ne.s32.totalorder %s75, %s76
      %p87 = scmp.eq.s32.totalorder %s27, 0
      %p88 = por %p86, %p87
      %p89 = scmp.ne.s32.totalorder %s75, %s76
      %p90 = scmp.eq.s32.totalorder %s28, 1
      %p91 = por %p89, %p90
      %p93 = scmp.ne.s32.totalorder %s76, %s92
      %p94 = scmp.eq.s32.totalorder %s28, 0
      %p95 = por %p93, %p94
      %s97 = sadd.s32 %s96, 1
      %p100 = scmp.eq.s32.totalorder %s22, 1
      %p101 = scmp.ne.s32.totalorder %s96, %s98
      %p102 = scmp.eq.s32.totalorder %s22, 0
      %p103 = por %p101, %p102
      %p104 = scmp.ne.s32.totalorder %s96, %s98
      %p105 = scmp.eq.s32.totalorder %s27, 1
      %p106 = por %p104, %p105
      %p107 = scmp.ne.s32.totalorder %s98, %s99
      %p108 = scmp.eq.s32.totalorder %s27, 0
      %p109 = por %p107, %p108
      %p110 = scmp.ne.s32.totalorder %s98, %s99
      %p111 = scmp.eq.s32.totalorder %s28, 1
      %p112 = por %p110, %p111
      %p114 = scmp.ne.s32.totalorder %s99, %s113
      %p115 = scmp.eq.s32.totalorder %s28, 0
      %p116 = por %p114, %p115
      %s118 = sadd.s32 %s117, 1
      %p121 = scmp.eq.s32.totalorder %s22, 1
      %p122 = scmp.ne.s32.totalorder %s117, %s119
      %p123 = scmp.eq.s32.totalorder %s22, 0
      %p124 = por %p122, %p123
      %p125 = scmp.ne.s32.totalorder %s117, %s119
      %p126 = scmp.eq.s32.totalorder %s27, 1
      %p127 = por %p125, %p126
      %p128 = scmp.ne.s32.totalorder %s119, %s120
      %p129 = scmp.eq.s32.totalorder %s27, 0
      %p130 = por %p128, %p129
      %p131 = scmp.ne.s32.totalorder %s119, %s120
      %p132 = scmp.eq.s32.totalorder %s28, 1
      %p133 = por %p131, %p132
      %p135 = scmp.ne.s32.totalorder %s120, %s134
      %p136 = scmp.eq.s32.totalorder %s28, 0
      %p137 = por %p135, %p136
      %s139 = sadd.s32 %s138, 1
      %p142 = scmp.eq.s32.totalorder %s22, 1
      %p143 = scmp.ne.s32.totalorder %s138, %s140
      %p144 = scmp.eq.s32.totalorder %s22, 0
      %p145 = por %p143, %p144
      %p146 = scmp.ne.s32.totalorder %s138, %s140
      %p147 = scmp.eq.s32.totalorder %s27, 1
      %p148 = por %p146, %p147
      %p149 = scmp.ne.s32.totalorder %s140, %s141
      %p150 = scmp.eq.s32.totalorder %s27, 0
      %p151 = por %p149, %p150
      %p152 = scmp.ne.s32.totalorder %s140, %s141
      %p153 = scmp.eq.s32.totalorder %s28, 1
      %p154 = por %p152, %p153
      %p156 = scmp.ne.s32.totalorder %s141, %s155
      %p157 = scmp.eq.s32.totalorder %s28, 0
      %p158 = por %p156, %p157
      %s159 = ssub.s32 %s30, %s37
      %s160 = ssub.s32 %s29, %s41
      %s161 = sor.u32 %s159, %s160
      %p162 = scmp.eq.s32.totalorder %s161, 0
      %s164 = sadd.s32 %s163, 1
      %s165 = scalar_select %p162, %s163, %s164
      %p168 = pneg %p162
      %p169 = scmp.eq.s32.totalorder %s22, 1
      %p170 = por %p168, %p169
      %p171 = scmp.ne.s32.totalorder %s163, %s166
      %p172 = scmp.eq.s32.totalorder %s22, 0
      %p173 = por %p171, %p172
      %p174 = scmp.ne.s32.totalorder %s163, %s166
      %p175 = scmp.eq.s32.totalorder %s27, 1
      %p176 = por %p174, %p175
      %p177 = scmp.ne.s32.totalorder %s166, %s167
      %p178 = scmp.eq.s32.totalorder %s27, 0
      %p179 = por %p177, %p178
      %p180 = scmp.ne.s32.totalorder %s166, %s167
      %p181 = scmp.eq.s32.totalorder %s28, 1
      %p182 = por %p180, %p181
      %p184 = scmp.ne.s32.totalorder %s167, %s183
      %p185 = scmp.eq.s32.totalorder %s28, 0
      %p186 = por %p184, %p185
      %s187 = ssub.s32 %s29, %s41
      %p188 = scmp.eq.s32.totalorder %s187, 0
      %s190 = sadd.s32 %s189, 1
      %s191 = scalar_select %p188, %s189, %s190
      %p194 = pneg %p188
      %p195 = scmp.eq.s32.totalorder %s22, 1
      %p196 = por %p194, %p195
      %p197 = scmp.ne.s32.totalorder %s189, %s192
      %p198 = scmp.eq.s32.totalorder %s22, 0
      %p199 = por %p197, %p198
      %p200 = scmp.ne.s32.totalorder %s189, %s192
      %p201 = scmp.eq.s32.totalorder %s27, 1
      %p202 = por %p200, %p201
      %p203 = scmp.ne.s32.totalorder %s192, %s193
      %p204 = scmp.eq.s32.totalorder %s27, 0
      %p205 = por %p203, %p204
      %p206 = scmp.ne.s32.totalorder %s192, %s193
      %p207 = scmp.eq.s32.totalorder %s28, 1
      %p208 = por %p206, %p207
      %p210 = scmp.ne.s32.totalorder %s193, %s209
      %p211 = scmp.eq.s32.totalorder %s28, 0
      %p212 = por %p210, %p211
      %p213 = scmp.le.s32.totalorder 1, %s22
      %p214 = scmp.lt.s32.totalorder %s22, 3
      %p215 = pnand %p213, %p214
      %p216 = pneg %p215
      // Predicated region
      $region9: #{tpu_custom_call.1} parent=5 // pred_check
        _
      $region10: #{tpu_custom_call.1} parent=5 // pred_check_branch
        %218 = sbr.rel (%p215) target = $region12
      $region11: #{tpu_custom_call.1} parent=5 // pred_region
        %s219 = ssub.s32 %s22, 1
        // Predicated region
        $region13: #{tpu_custom_call.1} parent=11 // pred_check
          %p220 = pneg %p88
        $region14: #{tpu_custom_call.1} parent=11 // pred_check_branch
          %222 = sbr.rel (%p220) target = $region16
        $region15: #{tpu_custom_call.1} parent=11 // pred_region
          %s224 = ssub.s32 128, 128
          %225 = vsyncadd [#allocation7], %s224
          %s226 = smul.addr %s31, 128
          %s227 = scalar_lea.hbm %s1, %s226
          %s229 = sshll.u32 [#allocation6], 4
          %s230 = int_to_ptr.vmem [resolvable:$true] %s229
          %232 = dma.hbm_to_vmem [thread:$0]  %s227, 128, %s230, [#allocation7]
        $region16: #{tpu_custom_call.1} parent=11 // pred_fallthru
          _
        // Predicated region
        $region17: #{tpu_custom_call.1} parent=11 // pred_check
          %p233 = pneg %p109
        $region18: #{tpu_custom_call.1} parent=11 // pred_check_branch
          %235 = sbr.rel (%p233) target = $region20
        $region19: #{tpu_custom_call.1} parent=11 // pred_region
          %s237 = ssub.s32 256, 256
          %238 = vsyncadd [#allocation7], %s237
          %s239 = sshll.u32 [#allocation8], 4
          %s240 = int_to_ptr.vmem [resolvable:$true] %s239
          %245 = dma.hbm_to_vmem [thread:$0]  %s2, 256, %s240, [#allocation7], 128, 128, 8
        $region20: #{tpu_custom_call.1} parent=11 // pred_fallthru
          _
        // Predicated region
        $region21: #{tpu_custom_call.1} parent=11 // pred_check
          %p246 = pneg %p130
        $region22: #{tpu_custom_call.1} parent=11 // pred_check_branch
          %248 = sbr.rel (%p246) target = $region24
        $region23: #{tpu_custom_call.1} parent=11 // pred_region
          %s250 = ssub.s32 2048, 2048
          %251 = vsyncadd [#allocation10], %s250
          %s252 = sshll.u32 [#allocation9], 4
          %s253 = int_to_ptr.vmem [resolvable:$true] %s252
          %258 = dma.hbm_to_vmem [thread:$0]  %s3, 2048, %s253, [#allocation10], 128, 128, 8
        $region24: #{tpu_custom_call.1} parent=11 // pred_fallthru
          _
        // Predicated region
        $region25: #{tpu_custom_call.1} parent=11 // pred_check
          %p259 = pneg %p151
        $region26: #{tpu_custom_call.1} parent=11 // pred_check_branch
          %261 = sbr.rel (%p259) target = $region28
        $region27: #{tpu_custom_call.1} parent=11 // pred_region
          _
        $region28: #{tpu_custom_call.1} parent=11 // pred_fallthru
          _
      $region12: #{tpu_custom_call.1} parent=5 // pred_fallthru
        _
      %p262 = scmp.lt.s32.totalorder %s22, 2
      // Predicated region
      $region29: #{tpu_custom_call.1} parent=5 // pred_check
        %p263 = pneg %p262
      $region30: #{tpu_custom_call.1} parent=5 // pred_check_branch
        %265 = sbr.rel (%p263) target = $region32
      $region31: #{tpu_custom_call.1} parent=5 // pred_region
        // Predicated region
        $region33: #{tpu_custom_call.1} parent=31 // pred_check
          %p266 = pneg %p56
        $region34: #{tpu_custom_call.1} parent=31 // pred_check_branch
          %268 = sbr.rel (%p266) target = $region36
        $region35: #{tpu_custom_call.1} parent=31 // pred_region
          %s269 = sand.u32 %s46, 1
          %s270 = scalar_lea.sflag [#allocation4], %s269
          %s271 = sand.u32 %s46, 1
          %s272 = smul.addr %s271, 32
          %s273 = scalar_lea.vmem [#allocation3], %s272
          %s274 = smul.u32 4, %s30
          %s276 = ssub.s32 512, 512
          %277 = vsyncadd %s270, %s276
          %s278 = sadd.s32 %s29, %s274
          %s279 = smul.addr %s278, 128
          %s280 = scalar_lea.hbm %s0, %s279
          %s281 = sshll.u32 %s273, 4
          %s282 = int_to_ptr.vmem [resolvable:$true] %s281
          %287 = dma.hbm_to_vmem [thread:$0]  %s280, 512, %s282, %s270, 128, 128, 8
        $region36: #{tpu_custom_call.1} parent=31 // pred_fallthru
          _
      $region32: #{tpu_custom_call.1} parent=5 // pred_fallthru
        _
      %p288 = scmp.le.s32.totalorder 1, %s22
      %p289 = scmp.lt.s32.totalorder %s22, 3
      %p290 = pnand %p288, %p289
      %p291 = pneg %p290
      // Predicated region
      $region37: #{tpu_custom_call.1} parent=5 // pred_check
        _
      $region38: #{tpu_custom_call.1} parent=5 // pred_check_branch
        %293 = sbr.rel (%p290) target = $region40
      $region39: #{tpu_custom_call.1} parent=5 // pred_region
        %s294 = ssub.s32 %s22, 1
        %s295 = sand.u32 %s49, 1
        %s296 = scalar_lea.sflag [#allocation4], %s295
        %s297 = sand.u32 %s49, 1
        %s298 = smul.addr %s297, 32
        %s299 = scalar_lea.vmem [#allocation3], %s298
        // Predicated region
        $region41: #{tpu_custom_call.1} parent=39 // pred_check
          %p300 = pneg %p62
        $region42: #{tpu_custom_call.1} parent=39 // pred_check_branch
          %302 = sbr.rel (%p300) target = $region44
        $region43: #{tpu_custom_call.1} parent=39 // pred_region
          %303 = dma.done %s296, 512
        $region44: #{tpu_custom_call.1} parent=39 // pred_fallthru
          _
        // Predicated region
        $region45: #{tpu_custom_call.1} parent=39 // pred_check
          %p304 = pneg %p88
        $region46: #{tpu_custom_call.1} parent=39 // pred_check_branch
          %306 = sbr.rel (%p304) target = $region48
        $region47: #{tpu_custom_call.1} parent=39 // pred_region
          %307 = dma.done [#allocation7], 128
        $region48: #{tpu_custom_call.1} parent=39 // pred_fallthru
          _
        // Predicated region
        $region49: #{tpu_custom_call.1} parent=39 // pred_check
          %p308 = pneg %p109
        $region50: #{tpu_custom_call.1} parent=39 // pred_check_branch
          %310 = sbr.rel (%p308) target = $region52
        $region51: #{tpu_custom_call.1} parent=39 // pred_region
          %311 = dma.done [#allocation7], 256
        $region52: #{tpu_custom_call.1} parent=39 // pred_fallthru
          _
        // Predicated region
        $region53: #{tpu_custom_call.1} parent=39 // pred_check
          %p312 = pneg %p130
        $region54: #{tpu_custom_call.1} parent=39 // pred_check_branch
          %314 = sbr.rel (%p312) target = $region56
        $region55: #{tpu_custom_call.1} parent=39 // pred_region
          %315 = dma.done [#allocation10], 2048
        $region56: #{tpu_custom_call.1} parent=39 // pred_fallthru
          _
        %s316 = sand.u32 %s49, 1
        %s317 = scalar_lea.sflag [#allocation4], %s316
        %s318 = sand.u32 %s49, 1
        %s319 = smul.addr %s318, 32
        %s320 = scalar_lea.vmem [#allocation3], %s319
        %p321 = pneg %p62
        %p322 = pneg %p59
        %p323 = pneg %p88
        %p324 = pneg %p85
        %p325 = pneg %p109
        %p326 = pneg %p106
        %p327 = pneg %p130
        %p328 = pneg %p127
        %p329 = pneg %p151
        %p330 = pneg %p148
        %p331 = pneg %p179
        %p332 = pneg %p176
        %s333 = sand.u32 %s166, 1
        %s334 = scalar_lea.sflag [#allocation5], %s333
        %s335 = sand.u32 %s166, 1
        %s336 = smul.addr %s335, 32
        %s337 = scalar_lea.vmem [#allocation11], %s336
        %p338 = pneg %p205
        %p339 = pneg %p202
        %s340 = smul.u32 4, %s32
        %s341 = smul.u32 4, %s32
        %p342 = scmp.eq.s32.totalorder %s32, 0
        // Predicated region
        $region57: #{tpu_custom_call.1} parent=39 // pred_check
          %p343 = pneg %p342
        $region58: #{tpu_custom_call.1} parent=39 // pred_check_branch
          %345 = sbr.rel (%p343) target = $region60
        $region59: #{tpu_custom_call.1} parent=39 // pred_region
          %v346 = vld [vmem:[#allocation6] sm:$0xff]
          %347 = vst [vmem:[#allocation2] sm:$0xff] %v346
        $region60: #{tpu_custom_call.1} parent=39 // pred_fallthru
          _
        %v348 = vld [vmem:[#allocation8] sm:$0xff]
        %v349 = vld [vmem:[#allocation8 + $0x8] sm:$0xff]
        %v350 = vld [vmem:[#allocation9] sm:$0xff]
        %v351 = vld [vmem:[#allocation9 + $0x8] sm:$0xff]
        %v352 = vld [vmem:[#allocation9 + $0x10] sm:$0xff]
        %v353 = vld [vmem:[#allocation9 + $0x18] sm:$0xff]
        %v354 = vld [vmem:[#allocation9 + $0x20] sm:$0xff]
        %v355 = vld [vmem:[#allocation9 + $0x28] sm:$0xff]
        %v356 = vld [vmem:[#allocation9 + $0x30] sm:$0xff]
        %v357 = vld [vmem:[#allocation9 + $0x38] sm:$0xff]
        %v358 = vld [vmem:[#allocation9 + $0x40] sm:$0xff]
        %v359 = vld [vmem:[#allocation9 + $0x48] sm:$0xff]
        %v360 = vld [vmem:[#allocation9 + $0x50] sm:$0xff]
        %v361 = vld [vmem:[#allocation9 + $0x58] sm:$0xff]
        %v362 = vld [vmem:[#allocation9 + $0x60] sm:$0xff]
        %v363 = vld [vmem:[#allocation9 + $0x68] sm:$0xff]
        %v364 = vld [vmem:[#allocation9 + $0x70] sm:$0xff]
        %v365 = vld [vmem:[#allocation9 + $0x78] sm:$0xff]
        %v366 = vld [vmem:[%s4] sm:$0x1]
        %v367 = vlaneseq
        %v368 = vand.u32 %v367, 127
        %vm369 = vcmp.ge.s32.totalorder %v368, 32
        %vm370 = vcmp.lt.s32.totalorder %v368, 40
        %vm371 = vmand %vm369, %vm370
        %v372 = vlaneseq
        %v373 = vshrl.u32 %v372, 7
        %s374 = smul.u32 %s31, 8
        %v375 = vstv %s374
        %v376 = vadd.s32 %v375, %v373
        %vm377 = vcmp.lt.s32.totalorder %v376, 2
        %v378 = vld [vmem:[%s299] sm:$0xff]
        %v379 = vld [vmem:[#allocation2] sm:$0xff]
        %380 = vmatprep.subr.mxu0 0.0
        %381 = vmatpush1.msra.mxu0 %v365
        %382 = vmatprep.subr.mxu0 0.0
        %383 = vmatpush1.msra.mxu0 %v364
        %384 = vmatprep.subr.mxu0 0.0
        %385 = vmatpush1.msra.mxu0 %v363
        %386 = vmatprep.subr.mxu0 0.0
        %387 = vmatpush1.msra.mxu0 %v362
        %388 = vmatprep.subr.mxu0 0.0
        %389 = vmatpush1.msra.mxu0 %v361
        %390 = vmatprep.subr.mxu0 0.0
        %391 = vmatpush1.msra.mxu0 %v360
        %392 = vmatprep.subr.mxu0 0.0
        %393 = vmatpush1.msra.mxu0 %v359
        %394 = vmatprep.subr.mxu0 0.0
        %395 = vmatpush1.msra.mxu0 %v358
        %396 = vmatprep.subr.mxu0 0.0
        %397 = vmatpush1.msra.mxu0 %v357
        %398 = vmatprep.subr.mxu0 0.0
        %399 = vmatpush1.msra.mxu0 %v356
        %400 = vmatprep.subr.mxu0 0.0
        %401 = vmatpush1.msra.mxu0 %v355
        %402 = vmatprep.subr.mxu0 0.0
        %403 = vmatpush1.msra.mxu0 %v354
        %404 = vmatprep.subr.mxu0 0.0
        %405 = vmatpush1.msra.mxu0 %v353
        %406 = vmatprep.subr.mxu0 0.0
        %407 = vmatpush1.msra.mxu0 %v352
        %408 = vmatprep.subr.mxu0 0.0
        %409 = vmatpush1.msra.mxu0 %v351
        %410 = vmatprep.subr.mxu0 0.0
        %411 = vmatpush1.msra.mxu0 %v350
        %412 = vmatprep.subr.mxu0 0.0
        %413 = vmatpush2.msra.mxu0 0.0
        %414 = vmatprep.subr.mxu0 0.0
        %415 = vmatpush2.msra.mxu0 0.0
        %416 = vmatprep.subr.mxu0 0.0
        %417 = vmatpush2.msra.mxu0 0.0
        %418 = vmatprep.subr.mxu0 0.0
        %419 = vmatpush2.msra.mxu0 0.0
        %420 = vmatprep.subr.mxu0 0.0
        %421 = vmatpush2.msra.mxu0 0.0
        %422 = vmatprep.subr.mxu0 0.0
        %423 = vmatpush2.msra.mxu0 0.0
        %424 = vmatprep.subr.mxu0 0.0
        %425 = vmatpush2.msra.mxu0 0.0
        %426 = vmatprep.subr.mxu0 0.0
        %427 = vmatpush2.msra.mxu0 0.0
        %428 = vmatprep.subr.mxu0 0.0
        %429 = vmatpush2.msra.mxu0 0.0
        %430 = vmatprep.subr.mxu0 0.0
        %431 = vmatpush2.msra.mxu0 0.0
        %432 = vmatprep.subr.mxu0 0.0
        %433 = vmatpush2.msra.mxu0 0.0
        %434 = vmatprep.subr.mxu0 0.0
        %435 = vmatpush2.msra.mxu0 0.0
        %436 = vmatprep.subr.mxu0 0.0
        %437 = vmatpush2.msra.mxu0 0.0
        %438 = vmatprep.subr.mxu0 0.0
        %439 = vmatpush2.msra.mxu0 0.0
        %440 = vmatprep.subr.mxu0 0.0
        %441 = vmatpush2.msra.mxu0 0.0
        %442 = vmatprep.subr.mxu0 0.0
        %443 = vmatpush2.msra.mxu0 0.0
        %444 = vmatprep.mubr.f32.mxu0 0.0
        %445 = vmatmul.mubr.f32.gmra.mxu0 %v379
        %v446 = vpop.f32.mrf.mxu0
        %v447 = vadd.f32 0.0, %v446
        %v448 = vpop.f32.mrf.mxu0
        %449 = vdwg.mxu0
        %vm450 = vcmask 130048
        %v452 = vsel %vm450, %v378, 0
        %454 = vmatprep.subr.mxu0 0.0
        %455 = vmatpush1.msra.mxu0 0.0
        %456 = vmatprep.subr.mxu0 0.0
        %457 = vmatpush1.msra.mxu0 0.0
        %458 = vmatprep.subr.mxu0 0.0
        %459 = vmatpush1.msra.mxu0 0.0
        %460 = vmatprep.subr.mxu0 0.0
        %461 = vmatpush1.msra.mxu0 0.0
        %462 = vmatprep.subr.mxu0 0.0
        %463 = vmatpush1.msra.mxu0 0.0
        %464 = vmatprep.subr.mxu0 0.0
        %465 = vmatpush1.msra.mxu0 0.0
        %466 = vmatprep.subr.mxu0 0.0
        %467 = vmatpush1.msra.mxu0 0.0
        %468 = vmatprep.subr.mxu0 0.0
        %469 = vmatpush1.msra.mxu0 0.0
        %470 = vmatprep.subr.mxu0 0.0
        %471 = vmatpush1.msra.mxu0 0.0
        %472 = vmatprep.subr.mxu0 0.0
        %473 = vmatpush1.msra.mxu0 0.0
        %474 = vmatprep.subr.mxu0 0.0
        %475 = vmatpush1.msra.mxu0 0.0
        %476 = vmatprep.subr.mxu0 0.0
        %477 = vmatpush1.msra.mxu0 0.0
        %478 = vmatprep.subr.mxu0 0.0
        %479 = vmatpush1.msra.mxu0 0.0
        %480 = vmatprep.subr.mxu0 0.0
        %481 = vmatpush1.msra.mxu0 0.0
        %482 = vmatprep.subr.mxu0 0.0
        %483 = vmatpush1.msra.mxu0 %v349
        %484 = vmatprep.subr.mxu0 0.0
        %485 = vmatpush1.msra.mxu0 %v348
        %486 = vmatprep.subr.mxu0 0.0
        %487 = vmatpush2.msra.mxu0 0.0
        %488 = vmatprep.subr.mxu0 0.0
        %489 = vmatpush2.msra.mxu0 0.0
        %490 = vmatprep.subr.mxu0 0.0
        %491 = vmatpush2.msra.mxu0 0.0
        %492 = vmatprep.subr.mxu0 0.0
        %493 = vmatpush2.msra.mxu0 0.0
        %494 = vmatprep.subr.mxu0 0.0
        %495 = vmatpush2.msra.mxu0 0.0
        %496 = vmatprep.subr.mxu0 0.0
        %497 = vmatpush2.msra.mxu0 0.0
        %498 = vmatprep.subr.mxu0 0.0
        %499 = vmatpush2.msra.mxu0 0.0
        %500 = vmatprep.subr.mxu0 0.0
        %501 = vmatpush2.msra.mxu0 0.0
        %502 = vmatprep.subr.mxu0 0.0
        %503 = vmatpush2.msra.mxu0 0.0
        %504 = vmatprep.subr.mxu0 0.0
        %505 = vmatpush2.msra.mxu0 0.0
        %506 = vmatprep.subr.mxu0 0.0
        %507 = vmatpush2.msra.mxu0 0.0
        %508 = vmatprep.subr.mxu0 0.0
        %509 = vmatpush2.msra.mxu0 0.0
        %510 = vmatprep.subr.mxu0 0.0
        %511 = vmatpush2.msra.mxu0 0.0
        %512 = vmatprep.subr.mxu0 0.0
        %513 = vmatpush2.msra.mxu0 0.0
        %514 = vmatprep.subr.mxu0 0.0
        %515 = vmatpush2.msra.mxu0 0.0
        %516 = vmatprep.subr.mxu0 0.0
        %517 = vmatpush2.msra.mxu0 0.0
        %518 = vmatprep.mubr.f32.mxu0 0.0
        %519 = vmatmul.mubr.f32.gmra.mxu0 %v452
        %v520 = vpop.f32.mrf.mxu0
        %v521 = vadd.f32 %v447, %v520
        %v522 = vpop.f32.mrf.mxu0
        %523 = vdwg.mxu0
        %v525 = vlaneseq
        %v526 = vshrl.u32 %v525, 7
        %v527 = vsub.s32 0, %v526
        %v528 = vrot.slane %v366, %v527
        %v530 = vadd.f32 %v521, %v528
        %v531 = vsel %vm377, %v530, 0.0
        %532 = vst [vmem:[#allocation2] sm:$0xff] %v531
        %v533 = vsel %vm371, %v531, -1e+30
        %534 = vmax.xlane.f32.xlu0 %v533
        %v535 = vpop.xlane.xlu0 %534
        %v536 = vsub.f32 %v533, %v535
        %v537 = vmul.f32 %v536, 1.442695
        %v538 = vpow.pop %v537
        %539 = vadd.xlane.f32.xlu0 %v538
        %v540 = vpop.xlane.xlu0 %539
        %v541 = vlog2.pop %v540
        %v542 = vmul.f32 %v541, 0.6931472
        %v543 = vsub.f32 %v536, %v542
        %v544 = vsel %vm371, %v543, %v531
        %545 = vst [vmem:[%s337] sm:$0xff] %v544
        %s546 = scalar_lea.vmem %s299, 8 [#allocation3]
        %v547 = vld [vmem:[%s546] sm:$0xff]
        %v548 = vld [vmem:[#allocation2] sm:$0xff]
        %549 = vmatprep.subr.mxu0 0.0
        %550 = vmatpush1.msra.mxu0 %v365
        %551 = vmatprep.subr.mxu0 0.0
        %552 = vmatpush1.msra.mxu0 %v364
        %553 = vmatprep.subr.mxu0 0.0
        %554 = vmatpush1.msra.mxu0 %v363
        %555 = vmatprep.subr.mxu0 0.0
        %556 = vmatpush1.msra.mxu0 %v362
        %557 = vmatprep.subr.mxu0 0.0
        %558 = vmatpush1.msra.mxu0 %v361
        %559 = vmatprep.subr.mxu0 0.0
        %560 = vmatpush1.msra.mxu0 %v360
        %561 = vmatprep.subr.mxu0 0.0
        %562 = vmatpush1.msra.mxu0 %v359
        %563 = vmatprep.subr.mxu0 0.0
        %564 = vmatpush1.msra.mxu0 %v358
        %565 = vmatprep.subr.mxu0 0.0
        %566 = vmatpush1.msra.mxu0 %v357
        %567 = vmatprep.subr.mxu0 0.0
        %568 = vmatpush1.msra.mxu0 %v356
        %569 = vmatprep.subr.mxu0 0.0
        %570 = vmatpush1.msra.mxu0 %v355
        %571 = vmatprep.subr.mxu0 0.0
        %572 = vmatpush1.msra.mxu0 %v354
        %573 = vmatprep.subr.mxu0 0.0
        %574 = vmatpush1.msra.mxu0 %v353
        %575 = vmatprep.subr.mxu0 0.0
        %576 = vmatpush1.msra.mxu0 %v352
        %577 = vmatprep.subr.mxu0 0.0
        %578 = vmatpush1.msra.mxu0 %v351
        %579 = vmatprep.subr.mxu0 0.0
        %580 = vmatpush1.msra.mxu0 %v350
        %581 = vmatprep.subr.mxu0 0.0
        %582 = vmatpush2.msra.mxu0 0.0
        %583 = vmatprep.subr.mxu0 0.0
        %584 = vmatpush2.msra.mxu0 0.0
        %585 = vmatprep.subr.mxu0 0.0
        %586 = vmatpush2.msra.mxu0 0.0
        %587 = vmatprep.subr.mxu0 0.0
        %588 = vmatpush2.msra.mxu0 0.0
        %589 = vmatprep.subr.mxu0 0.0
        %590 = vmatpush2.msra.mxu0 0.0
        %591 = vmatprep.subr.mxu0 0.0
        %592 = vmatpush2.msra.mxu0 0.0
        %593 = vmatprep.subr.mxu0 0.0
        %594 = vmatpush2.msra.mxu0 0.0
        %595 = vmatprep.subr.mxu0 0.0
        %596 = vmatpush2.msra.mxu0 0.0
        %597 = vmatprep.subr.mxu0 0.0
        %598 = vmatpush2.msra.mxu0 0.0
        %599 = vmatprep.subr.mxu0 0.0
        %600 = vmatpush2.msra.mxu0 0.0
        %601 = vmatprep.subr.mxu0 0.0
        %602 = vmatpush2.msra.mxu0 0.0
        %603 = vmatprep.subr.mxu0 0.0
        %604 = vmatpush2.msra.mxu0 0.0
        %605 = vmatprep.subr.mxu0 0.0
        %606 = vmatpush2.msra.mxu0 0.0
        %607 = vmatprep.subr.mxu0 0.0
        %608 = vmatpush2.msra.mxu0 0.0
        %609 = vmatprep.subr.mxu0 0.0
        %610 = vmatpush2.msra.mxu0 0.0
        %611 = vmatprep.subr.mxu0 0.0
        %612 = vmatpush2.msra.mxu0 0.0
        %613 = vmatprep.mubr.f32.mxu0 0.0
        %614 = vmatmul.mubr.f32.gmra.mxu0 %v548
        %v615 = vpop.f32.mrf.mxu0
        %v616 = vadd.f32 0.0, %v615
        %v617 = vpop.f32.mrf.mxu0
        %618 = vdwg.mxu0
        %v620 = vsel %vm450, %v547, 0
        %622 = vmatprep.subr.mxu0 0.0
        %623 = vmatpush1.msra.mxu0 0.0
        %624 = vmatprep.subr.mxu0 0.0
        %625 = vmatpush1.msra.mxu0 0.0
        %626 = vmatprep.subr.mxu0 0.0
        %627 = vmatpush1.msra.mxu0 0.0
        %628 = vmatprep.subr.mxu0 0.0
        %629 = vmatpush1.msra.mxu0 0.0
        %630 = vmatprep.subr.mxu0 0.0
        %631 = vmatpush1.msra.mxu0 0.0
        %632 = vmatprep.subr.mxu0 0.0
        %633 = vmatpush1.msra.mxu0 0.0
        %634 = vmatprep.subr.mxu0 0.0
        %635 = vmatpush1.msra.mxu0 0.0
        %636 = vmatprep.subr.mxu0 0.0
        %637 = vmatpush1.msra.mxu0 0.0
        %638 = vmatprep.subr.mxu0 0.0
        %639 = vmatpush1.msra.mxu0 0.0
        %640 = vmatprep.subr.mxu0 0.0
        %641 = vmatpush1.msra.mxu0 0.0
        %642 = vmatprep.subr.mxu0 0.0
        %643 = vmatpush1.msra.mxu0 0.0
        %644 = vmatprep.subr.mxu0 0.0
        %645 = vmatpush1.msra.mxu0 0.0
        %646 = vmatprep.subr.mxu0 0.0
        %647 = vmatpush1.msra.mxu0 0.0
        %648 = vmatprep.subr.mxu0 0.0
        %649 = vmatpush1.msra.mxu0 0.0
        %650 = vmatprep.subr.mxu0 0.0
        %651 = vmatpush1.msra.mxu0 %v349
        %652 = vmatprep.subr.mxu0 0.0
        %653 = vmatpush1.msra.mxu0 %v348
        %654 = vmatprep.subr.mxu0 0.0
        %655 = vmatpush2.msra.mxu0 0.0
        %656 = vmatprep.subr.mxu0 0.0
        %657 = vmatpush2.msra.mxu0 0.0
        %658 = vmatprep.subr.mxu0 0.0
        %659 = vmatpush2.msra.mxu0 0.0
        %660 = vmatprep.subr.mxu0 0.0
        %661 = vmatpush2.msra.mxu0 0.0
        %662 = vmatprep.subr.mxu0 0.0
        %663 = vmatpush2.msra.mxu0 0.0
        %664 = vmatprep.subr.mxu0 0.0
        %665 = vmatpush2.msra.mxu0 0.0
        %666 = vmatprep.subr.mxu0 0.0
        %667 = vmatpush2.msra.mxu0 0.0
        %668 = vmatprep.subr.mxu0 0.0
        %669 = vmatpush2.msra.mxu0 0.0
        %670 = vmatprep.subr.mxu0 0.0
        %671 = vmatpush2.msra.mxu0 0.0
        %672 = vmatprep.subr.mxu0 0.0
        %673 = vmatpush2.msra.mxu0 0.0
        %674 = vmatprep.subr.mxu0 0.0
        %675 = vmatpush2.msra.mxu0 0.0
        %676 = vmatprep.subr.mxu0 0.0
        %677 = vmatpush2.msra.mxu0 0.0
        %678 = vmatprep.subr.mxu0 0.0
        %679 = vmatpush2.msra.mxu0 0.0
        %680 = vmatprep.subr.mxu0 0.0
        %681 = vmatpush2.msra.mxu0 0.0
        %682 = vmatprep.subr.mxu0 0.0
        %683 = vmatpush2.msra.mxu0 0.0
        %684 = vmatprep.subr.mxu0 0.0
        %685 = vmatpush2.msra.mxu0 0.0
        %686 = vmatprep.mubr.f32.mxu0 0.0
        %687 = vmatmul.mubr.f32.gmra.mxu0 %v620
        %v688 = vpop.f32.mrf.mxu0
        %v689 = vadd.f32 %v616, %v688
        %v690 = vpop.f32.mrf.mxu0
        %691 = vdwg.mxu0
        %v692 = vadd.f32 %v689, %v528
        %v693 = vsel %vm377, %v692, 0.0
        %694 = vst [vmem:[#allocation2] sm:$0xff] %v693
        %v695 = vsel %vm371, %v693, -1e+30
        %696 = vmax.xlane.f32.xlu0 %v695
        %v697 = vpop.xlane.xlu0 %696
        %v698 = vsub.f32 %v695, %v697
        %v699 = vmul.f32 %v698, 1.442695
        %v700 = vpow.pop %v699
        %701 = vadd.xlane.f32.xlu0 %v700
        %v702 = vpop.xlane.xlu0 %701
        %v703 = vlog2.pop %v702
        %v704 = vmul.f32 %v703, 0.6931472
        %v705 = vsub.f32 %v698, %v704
        %v706 = vsel %vm371, %v705, %v693
        %s707 = scalar_lea.vmem %s337, 8 [#allocation11]
        %708 = vst [vmem:[%s707] sm:$0xff] %v706
        %s709 = scalar_lea.vmem %s299, 16 [#allocation3]
        %v710 = vld [vmem:[%s709] sm:$0xff]
        %v711 = vld [vmem:[#allocation2] sm:$0xff]
        %712 = vmatprep.subr.mxu0 0.0
        %713 = vmatpush1.msra.mxu0 %v365
        %714 = vmatprep.subr.mxu0 0.0
        %715 = vmatpush1.msra.mxu0 %v364
        %716 = vmatprep.subr.mxu0 0.0
        %717 = vmatpush1.msra.mxu0 %v363
        %718 = vmatprep.subr.mxu0 0.0
        %719 = vmatpush1.msra.mxu0 %v362
        %720 = vmatprep.subr.mxu0 0.0
        %721 = vmatpush1.msra.mxu0 %v361
        %722 = vmatprep.subr.mxu0 0.0
        %723 = vmatpush1.msra.mxu0 %v360
        %724 = vmatprep.subr.mxu0 0.0
        %725 = vmatpush1.msra.mxu0 %v359
        %726 = vmatprep.subr.mxu0 0.0
        %727 = vmatpush1.msra.mxu0 %v358
        %728 = vmatprep.subr.mxu0 0.0
        %729 = vmatpush1.msra.mxu0 %v357
        %730 = vmatprep.subr.mxu0 0.0
        %731 = vmatpush1.msra.mxu0 %v356
        %732 = vmatprep.subr.mxu0 0.0
        %733 = vmatpush1.msra.mxu0 %v355
        %734 = vmatprep.subr.mxu0 0.0
        %735 = vmatpush1.msra.mxu0 %v354
        %736 = vmatprep.subr.mxu0 0.0
        %737 = vmatpush1.msra.mxu0 %v353
        %738 = vmatprep.subr.mxu0 0.0
        %739 = vmatpush1.msra.mxu0 %v352
        %740 = vmatprep.subr.mxu0 0.0
        %741 = vmatpush1.msra.mxu0 %v351
        %742 = vmatprep.subr.mxu0 0.0
        %743 = vmatpush1.msra.mxu0 %v350
        %744 = vmatprep.subr.mxu0 0.0
        %745 = vmatpush2.msra.mxu0 0.0
        %746 = vmatprep.subr.mxu0 0.0
        %747 = vmatpush2.msra.mxu0 0.0
        %748 = vmatprep.subr.mxu0 0.0
        %749 = vmatpush2.msra.mxu0 0.0
        %750 = vmatprep.subr.mxu0 0.0
        %751 = vmatpush2.msra.mxu0 0.0
        %752 = vmatprep.subr.mxu0 0.0
        %753 = vmatpush2.msra.mxu0 0.0
        %754 = vmatprep.subr.mxu0 0.0
        %755 = vmatpush2.msra.mxu0 0.0
        %756 = vmatprep.subr.mxu0 0.0
        %757 = vmatpush2.msra.mxu0 0.0
        %758 = vmatprep.subr.mxu0 0.0
        %759 = vmatpush2.msra.mxu0 0.0
        %760 = vmatprep.subr.mxu0 0.0
        %761 = vmatpush2.msra.mxu0 0.0
        %762 = vmatprep.subr.mxu0 0.0
        %763 = vmatpush2.msra.mxu0 0.0
        %764 = vmatprep.subr.mxu0 0.0
        %765 = vmatpush2.msra.mxu0 0.0
        %766 = vmatprep.subr.mxu0 0.0
        %767 = vmatpush2.msra.mxu0 0.0
        %768 = vmatprep.subr.mxu0 0.0
        %769 = vmatpush2.msra.mxu0 0.0
        %770 = vmatprep.subr.mxu0 0.0
        %771 = vmatpush2.msra.mxu0 0.0
        %772 = vmatprep.subr.mxu0 0.0
        %773 = vmatpush2.msra.mxu0 0.0
        %774 = vmatprep.subr.mxu0 0.0
        %775 = vmatpush2.msra.mxu0 0.0
        %776 = vmatprep.mubr.f32.mxu0 0.0
        %777 = vmatmul.mubr.f32.gmra.mxu0 %v711
        %v778 = vpop.f32.mrf.mxu0
        %v779 = vadd.f32 0.0, %v778
        %v780 = vpop.f32.mrf.mxu0
        %781 = vdwg.mxu0
        %v783 = vsel %vm450, %v710, 0
        %785 = vmatprep.subr.mxu0 0.0
        %786 = vmatpush1.msra.mxu0 0.0
        %787 = vmatprep.subr.mxu0 0.0
        %788 = vmatpush1.msra.mxu0 0.0
        %789 = vmatprep.subr.mxu0 0.0
        %790 = vmatpush1.msra.mxu0 0.0
        %791 = vmatprep.subr.mxu0 0.0
        %792 = vmatpush1.msra.mxu0 0.0
        %793 = vmatprep.subr.mxu0 0.0
        %794 = vmatpush1.msra.mxu0 0.0
        %795 = vmatprep.subr.mxu0 0.0
        %796 = vmatpush1.msra.mxu0 0.0
        %797 = vmatprep.subr.mxu0 0.0
        %798 = vmatpush1.msra.mxu0 0.0
        %799 = vmatprep.subr.mxu0 0.0
        %800 = vmatpush1.msra.mxu0 0.0
        %801 = vmatprep.subr.mxu0 0.0
        %802 = vmatpush1.msra.mxu0 0.0
        %803 = vmatprep.subr.mxu0 0.0
        %804 = vmatpush1.msra.mxu0 0.0
        %805 = vmatprep.subr.mxu0 0.0
        %806 = vmatpush1.msra.mxu0 0.0
        %807 = vmatprep.subr.mxu0 0.0
        %808 = vmatpush1.msra.mxu0 0.0
        %809 = vmatprep.subr.mxu0 0.0
        %810 = vmatpush1.msra.mxu0 0.0
        %811 = vmatprep.subr.mxu0 0.0
        %812 = vmatpush1.msra.mxu0 0.0
        %813 = vmatprep.subr.mxu0 0.0
        %814 = vmatpush1.msra.mxu0 %v349
        %815 = vmatprep.subr.mxu0 0.0
        %816 = vmatpush1.msra.mxu0 %v348
        %817 = vmatprep.subr.mxu0 0.0
        %818 = vmatpush2.msra.mxu0 0.0
        %819 = vmatprep.subr.mxu0 0.0
        %820 = vmatpush2.msra.mxu0 0.0
        %821 = vmatprep.subr.mxu0 0.0
        %822 = vmatpush2.msra.mxu0 0.0
        %823 = vmatprep.subr.mxu0 0.0
        %824 = vmatpush2.msra.mxu0 0.0
        %825 = vmatprep.subr.mxu0 0.0
        %826 = vmatpush2.msra.mxu0 0.0
        %827 = vmatprep.subr.mxu0 0.0
        %828 = vmatpush2.msra.mxu0 0.0
        %829 = vmatprep.subr.mxu0 0.0
        %830 = vmatpush2.msra.mxu0 0.0
        %831 = vmatprep.subr.mxu0 0.0
        %832 = vmatpush2.msra.mxu0 0.0
        %833 = vmatprep.subr.mxu0 0.0
        %834 = vmatpush2.msra.mxu0 0.0
        %835 = vmatprep.subr.mxu0 0.0
        %836 = vmatpush2.msra.mxu0 0.0
        %837 = vmatprep.subr.mxu0 0.0
        %838 = vmatpush2.msra.mxu0 0.0
        %839 = vmatprep.subr.mxu0 0.0
        %840 = vmatpush2.msra.mxu0 0.0
        %841 = vmatprep.subr.mxu0 0.0
        %842 = vmatpush2.msra.mxu0 0.0
        %843 = vmatprep.subr.mxu0 0.0
        %844 = vmatpush2.msra.mxu0 0.0
        %845 = vmatprep.subr.mxu0 0.0
        %846 = vmatpush2.msra.mxu0 0.0
        %847 = vmatprep.subr.mxu0 0.0
        %848 = vmatpush2.msra.mxu0 0.0
        %849 = vmatprep.mubr.f32.mxu0 0.0
        %850 = vmatmul.mubr.f32.gmra.mxu0 %v783
        %v851 = vpop.f32.mrf.mxu0
        %v852 = vadd.f32 %v779, %v851
        %v853 = vpop.f32.mrf.mxu0
        %854 = vdwg.mxu0
        %v855 = vadd.f32 %v852, %v528
        %v856 = vsel %vm377, %v855, 0.0
        %857 = vst [vmem:[#allocation2] sm:$0xff] %v856
        %v858 = vsel %vm371, %v856, -1e+30
        %859 = vmax.xlane.f32.xlu0 %v858
        %v860 = vpop.xlane.xlu0 %859
        %v861 = vsub.f32 %v858, %v860
        %v862 = vmul.f32 %v861, 1.442695
        %v863 = vpow.pop %v862
        %864 = vadd.xlane.f32.xlu0 %v863
        %v865 = vpop.xlane.xlu0 %864
        %v866 = vlog2.pop %v865
        %v867 = vmul.f32 %v866, 0.6931472
        %v868 = vsub.f32 %v861, %v867
        %v869 = vsel %vm371, %v868, %v856
        %s870 = scalar_lea.vmem %s337, 16 [#allocation11]
        %871 = vst [vmem:[%s870] sm:$0xff] %v869
        %s872 = scalar_lea.vmem %s299, 24 [#allocation3]
        %v873 = vld [vmem:[%s872] sm:$0xff]
        %v874 = vld [vmem:[#allocation2] sm:$0xff]
        %875 = vmatprep.subr.mxu0 0.0
        %876 = vmatpush1.msra.mxu0 %v365
        %877 = vmatprep.subr.mxu0 0.0
        %878 = vmatpush1.msra.mxu0 %v364
        %879 = vmatprep.subr.mxu0 0.0
        %880 = vmatpush1.msra.mxu0 %v363
        %881 = vmatprep.subr.mxu0 0.0
        %882 = vmatpush1.msra.mxu0 %v362
        %883 = vmatprep.subr.mxu0 0.0
        %884 = vmatpush1.msra.mxu0 %v361
        %885 = vmatprep.subr.mxu0 0.0
        %886 = vmatpush1.msra.mxu0 %v360
        %887 = vmatprep.subr.mxu0 0.0
        %888 = vmatpush1.msra.mxu0 %v359
        %889 = vmatprep.subr.mxu0 0.0
        %890 = vmatpush1.msra.mxu0 %v358
        %891 = vmatprep.subr.mxu0 0.0
        %892 = vmatpush1.msra.mxu0 %v357
        %893 = vmatprep.subr.mxu0 0.0
        %894 = vmatpush1.msra.mxu0 %v356
        %895 = vmatprep.subr.mxu0 0.0
        %896 = vmatpush1.msra.mxu0 %v355
        %897 = vmatprep.subr.mxu0 0.0
        %898 = vmatpush1.msra.mxu0 %v354
        %899 = vmatprep.subr.mxu0 0.0
        %900 = vmatpush1.msra.mxu0 %v353
        %901 = vmatprep.subr.mxu0 0.0
        %902 = vmatpush1.msra.mxu0 %v352
        %903 = vmatprep.subr.mxu0 0.0
        %904 = vmatpush1.msra.mxu0 %v351
        %905 = vmatprep.subr.mxu0 0.0
        %906 = vmatpush1.msra.mxu0 %v350
        %907 = vmatprep.subr.mxu0 0.0
        %908 = vmatpush2.msra.mxu0 0.0
        %909 = vmatprep.subr.mxu0 0.0
        %910 = vmatpush2.msra.mxu0 0.0
        %911 = vmatprep.subr.mxu0 0.0
        %912 = vmatpush2.msra.mxu0 0.0
        %913 = vmatprep.subr.mxu0 0.0
        %914 = vmatpush2.msra.mxu0 0.0
        %915 = vmatprep.subr.mxu0 0.0
        %916 = vmatpush2.msra.mxu0 0.0
        %917 = vmatprep.subr.mxu0 0.0
        %918 = vmatpush2.msra.mxu0 0.0
        %919 = vmatprep.subr.mxu0 0.0
        %920 = vmatpush2.msra.mxu0 0.0
        %921 = vmatprep.subr.mxu0 0.0
        %922 = vmatpush2.msra.mxu0 0.0
        %923 = vmatprep.subr.mxu0 0.0
        %924 = vmatpush2.msra.mxu0 0.0
        %925 = vmatprep.subr.mxu0 0.0
        %926 = vmatpush2.msra.mxu0 0.0
        %927 = vmatprep.subr.mxu0 0.0
        %928 = vmatpush2.msra.mxu0 0.0
        %929 = vmatprep.subr.mxu0 0.0
        %930 = vmatpush2.msra.mxu0 0.0
        %931 = vmatprep.subr.mxu0 0.0
        %932 = vmatpush2.msra.mxu0 0.0
        %933 = vmatprep.subr.mxu0 0.0
        %934 = vmatpush2.msra.mxu0 0.0
        %935 = vmatprep.subr.mxu0 0.0
        %936 = vmatpush2.msra.mxu0 0.0
        %937 = vmatprep.subr.mxu0 0.0
        %938 = vmatpush2.msra.mxu0 0.0
        %939 = vmatprep.mubr.f32.mxu0 0.0
        %940 = vmatmul.mubr.f32.gmra.mxu0 %v874
        %v941 = vpop.f32.mrf.mxu0
        %v942 = vadd.f32 0.0, %v941
        %v943 = vpop.f32.mrf.mxu0
        %944 = vdwg.mxu0
        %v946 = vsel %vm450, %v873, 0
        %948 = vmatprep.subr.mxu0 0.0
        %949 = vmatpush1.msra.mxu0 0.0
        %950 = vmatprep.subr.mxu0 0.0
        %951 = vmatpush1.msra.mxu0 0.0
        %952 = vmatprep.subr.mxu0 0.0
        %953 = vmatpush1.msra.mxu0 0.0
        %954 = vmatprep.subr.mxu0 0.0
        %955 = vmatpush1.msra.mxu0 0.0
        %956 = vmatprep.subr.mxu0 0.0
        %957 = vmatpush1.msra.mxu0 0.0
        %958 = vmatprep.subr.mxu0 0.0
        %959 = vmatpush1.msra.mxu0 0.0
        %960 = vmatprep.subr.mxu0 0.0
        %961 = vmatpush1.msra.mxu0 0.0
        %962 = vmatprep.subr.mxu0 0.0
        %963 = vmatpush1.msra.mxu0 0.0
        %964 = vmatprep.subr.mxu0 0.0
        %965 = vmatpush1.msra.mxu0 0.0
        %966 = vmatprep.subr.mxu0 0.0
        %967 = vmatpush1.msra.mxu0 0.0
        %968 = vmatprep.subr.mxu0 0.0
        %969 = vmatpush1.msra.mxu0 0.0
        %970 = vmatprep.subr.mxu0 0.0
        %971 = vmatpush1.msra.mxu0 0.0
        %972 = vmatprep.subr.mxu0 0.0
        %973 = vmatpush1.msra.mxu0 0.0
        %974 = vmatprep.subr.mxu0 0.0
        %975 = vmatpush1.msra.mxu0 0.0
        %976 = vmatprep.subr.mxu0 0.0
        %977 = vmatpush1.msra.mxu0 %v349
        %978 = vmatprep.subr.mxu0 0.0
        %979 = vmatpush1.msra.mxu0 %v348
        %980 = vmatprep.subr.mxu0 0.0
        %981 = vmatpush2.msra.mxu0 0.0
        %982 = vmatprep.subr.mxu0 0.0
        %983 = vmatpush2.msra.mxu0 0.0
        %984 = vmatprep.subr.mxu0 0.0
        %985 = vmatpush2.msra.mxu0 0.0
        %986 = vmatprep.subr.mxu0 0.0
        %987 = vmatpush2.msra.mxu0 0.0
        %988 = vmatprep.subr.mxu0 0.0
        %989 = vmatpush2.msra.mxu0 0.0
        %990 = vmatprep.subr.mxu0 0.0
        %991 = vmatpush2.msra.mxu0 0.0
        %992 = vmatprep.subr.mxu0 0.0
        %993 = vmatpush2.msra.mxu0 0.0
        %994 = vmatprep.subr.mxu0 0.0
        %995 = vmatpush2.msra.mxu0 0.0
        %996 = vmatprep.subr.mxu0 0.0
        %997 = vmatpush2.msra.mxu0 0.0
        %998 = vmatprep.subr.mxu0 0.0
        %999 = vmatpush2.msra.mxu0 0.0
        %1000 = vmatprep.subr.mxu0 0.0
        %1001 = vmatpush2.msra.mxu0 0.0
        %1002 = vmatprep.subr.mxu0 0.0
        %1003 = vmatpush2.msra.mxu0 0.0
        %1004 = vmatprep.subr.mxu0 0.0
        %1005 = vmatpush2.msra.mxu0 0.0
        %1006 = vmatprep.subr.mxu0 0.0
        %1007 = vmatpush2.msra.mxu0 0.0
        %1008 = vmatprep.subr.mxu0 0.0
        %1009 = vmatpush2.msra.mxu0 0.0
        %1010 = vmatprep.subr.mxu0 0.0
        %1011 = vmatpush2.msra.mxu0 0.0
        %1012 = vmatprep.mubr.f32.mxu0 0.0
        %1013 = vmatmul.mubr.f32.gmra.mxu0 %v946
        %v1014 = vpop.f32.mrf.mxu0
        %v1015 = vadd.f32 %v942, %v1014
        %v1016 = vpop.f32.mrf.mxu0
        %1017 = vdwg.mxu0
        %v1018 = vadd.f32 %v1015, %v528
        %v1019 = vsel %vm377, %v1018, 0.0
        %1020 = vst [vmem:[#allocation2] sm:$0xff] %v1019
        %v1021 = vsel %vm371, %v1019, -1e+30
        %1022 = vmax.xlane.f32.xlu0 %v1021
        %v1023 = vpop.xlane.xlu0 %1022
        %v1024 = vsub.f32 %v1021, %v1023
        %v1025 = vmul.f32 %v1024, 1.442695
        %v1026 = vpow.pop %v1025
        %1027 = vadd.xlane.f32.xlu0 %v1026
        %v1028 = vpop.xlane.xlu0 %1027
        %v1029 = vlog2.pop %v1028
        %v1030 = vmul.f32 %v1029, 0.6931472
        %v1031 = vsub.f32 %v1024, %v1030
        %v1032 = vsel %vm371, %v1031, %v1019
        %s1033 = scalar_lea.vmem %s337, 24 [#allocation11]
        %1034 = vst [vmem:[%s1033] sm:$0xff] %v1032
        %p1035 = scmp.eq.s32.totalorder %s32, 1
        // Predicated region
        $region61: #{tpu_custom_call.1} parent=39 // pred_check
          %p1036 = pneg %p1035
        $region62: #{tpu_custom_call.1} parent=39 // pred_check_branch
          %1038 = sbr.rel (%p1036) target = $region64
        $region63: #{tpu_custom_call.1} parent=39 // pred_region
          %v1039 = vld [vmem:[#allocation2] sm:$0xff]
          %1040 = vst [vmem:[#allocation12] sm:$0xff] %v1039
        $region64: #{tpu_custom_call.1} parent=39 // pred_fallthru
          _
        %s1041 = sand.u32 %s166, 1
        %s1042 = scalar_lea.sflag [#allocation5], %s1041
        %s1043 = sand.u32 %s166, 1
        %s1044 = smul.addr %s1043, 32
        %s1045 = scalar_lea.vmem [#allocation11], %s1044
        // Predicated region
        $region65: #{tpu_custom_call.1} parent=39 // pred_check
          %p1046 = pneg %p176
        $region66: #{tpu_custom_call.1} parent=39 // pred_check_branch
          %1048 = sbr.rel (%p1046) target = $region68
        $region67: #{tpu_custom_call.1} parent=39 // pred_region
          %s1049 = smul.u32 4, %s32
          %s1051 = ssub.s32 512, 512
          %1052 = vsyncadd %s1042, %s1051
          %s1053 = sadd.s32 %s31, %s1049
          %s1054 = smul.addr %s1053, 128
          %s1055 = scalar_lea.hbm %s5, %s1054
          %s1056 = sshll.u32 %s1045, 4
          %s1057 = int_to_ptr.vmem [resolvable:$true] %s1056
          %1062 = dma.vmem_to_hbm [thread:$0]  %s1057, 512, %s1055, %s1042, 128, 128, 8
        $region68: #{tpu_custom_call.1} parent=39 // pred_fallthru
          _
        // Predicated region
        $region69: #{tpu_custom_call.1} parent=39 // pred_check
          %p1063 = pneg %p202
        $region70: #{tpu_custom_call.1} parent=39 // pred_check_branch
          %1065 = sbr.rel (%p1063) target = $region72
        $region71: #{tpu_custom_call.1} parent=39 // pred_region
          %s1067 = ssub.s32 128, 128
          %1068 = vsyncadd [#allocation13], %s1067
          %s1069 = smul.addr %s31, 128
          %s1070 = scalar_lea.hbm %s6, %s1069
          %s1072 = sshll.u32 [#allocation12], 4
          %s1073 = int_to_ptr.vmem [resolvable:$true] %s1072
          %1075 = dma.vmem_to_hbm [thread:$0]  %s1073, 128, %s1070, [#allocation13]
        $region72: #{tpu_custom_call.1} parent=39 // pred_fallthru
          _
        // Predicated region
        $region73: #{tpu_custom_call.1} parent=39 // pred_check
          %p1076 = pneg %p202
        $region74: #{tpu_custom_call.1} parent=39 // pred_check_branch
          %1078 = sbr.rel (%p1076) target = $region76
        $region75: #{tpu_custom_call.1} parent=39 // pred_region
          %1079 = dma.done [#allocation13], 128
        $region76: #{tpu_custom_call.1} parent=39 // pred_fallthru
          _
      $region40: #{tpu_custom_call.1} parent=5 // pred_fallthru
        _
      %p1080 = scmp.le.s32.totalorder 2, %s22
      // Predicated region
      $region77: #{tpu_custom_call.1} parent=5 // pred_check
        %p1081 = pneg %p1080
      $region78: #{tpu_custom_call.1} parent=5 // pred_check_branch
        %1083 = sbr.rel (%p1081) target = $region80
      $region79: #{tpu_custom_call.1} parent=5 // pred_region
        %s1084 = ssub.s32 %s22, 2
        // Predicated region
        $region81: #{tpu_custom_call.1} parent=79 // pred_check
          %p1085 = pneg %p182
        $region82: #{tpu_custom_call.1} parent=79 // pred_check_branch
          %1087 = sbr.rel (%p1085) target = $region84
        $region83: #{tpu_custom_call.1} parent=79 // pred_region
          %s1088 = sand.u32 %s167, 1
          %s1089 = scalar_lea.sflag [#allocation5], %s1088
          %s1090 = sand.u32 %s167, 1
          %s1091 = smul.addr %s1090, 32
          %s1092 = scalar_lea.vmem [#allocation11], %s1091
          %1093 = dma.done %s1089, 512
        $region84: #{tpu_custom_call.1} parent=79 // pred_fallthru
          _
      $region80: #{tpu_custom_call.1} parent=5 // pred_fallthru
        _
    $region6: #{tpu_custom_call.1} parent=1 // loop_footer
      %s26 = sadd.s32 1, %s22
    $region7: #{tpu_custom_call.1} parent=1 // loop_footer_branch
      %21 = sbr.rel target = $region3
    $region8: #{tpu_custom_call.1} parent=1 // loop_exit
      _
    %1094 = vsyncpa [#allocation4], 1
    %s1095 = scalar_lea.sflag [#allocation4], 1
    %1096 = vsyncpa %s1095, 1
    %1097 = vsyncpa [#allocation7], 1
    %1098 = vsyncpa [#allocation10], 1
    %1099 = vsyncpa [#allocation5], 1
    %s1100 = scalar_lea.sflag [#allocation5], 1
    %1101 = vsyncpa %s1100, 1
    %1102 = vsyncpa [#allocation13], 1

</llo_original>
